<compile_context>
chip_gen: v6e
topology: v6e:2x2x1
jax: 0.10.0
libtpu: 0.0.40
codegen_flags: <defaults>
</compile_context>

<pallas_src>
import jax
import jax.numpy as jnp
from jax import lax
from jax.experimental import pallas as pl
from jax.experimental.pallas import tpu as pltpu


def basic_rnn_kernel(x_ref, h0_ref, wm_ref, bm_ref, wih_ref, bih_ref,
                     whh_r_ref, whh_z_ref, whh_n_ref,
                     bhh_r_ref, bhh_z_ref, bhh_n_ref,
                     out_ref,
                     gi_r_scr, gi_z_scr, gi_n_scr):
    """Fused MLP + GRU forward.

    x_ref    : (T*B, D_in)  time-major, pre-flattened input
    h0_ref   : (B, H)       initial hidden state (single layer)
    wm_ref   : (D_in, Hm)   MLP weight (pre-transposed: x @ wm)
    bm_ref   : (1, Hm)      MLP bias
    wih_ref  : (Hm, 3H)     GRU input weights (transposed), gate order [r, z, n]
    bih_ref  : (1, 3H)
    whh_*    : (H, H)       GRU hidden weights per gate (transposed)
    bhh_*    : (1, H)       GRU hidden bias per gate
    out_ref  : (T, B, H)    per-step hidden states (GRU output sequence)
    gi_*_scr : (T*B, H)     VMEM scratch holding the precomputed input-side gates
    """
    T, B, H = out_ref.shape

    # ---- MLP (Linear + ReLU) over all timesteps at once (one MXU matmul) ----
    mlp = jnp.dot(x_ref[...], wm_ref[...], preferred_element_type=jnp.float32)
    mlp = jnp.maximum(mlp + bm_ref[...], 0.0)                     # (T*B, Hm)

    # ---- GRU input projection hoisted out of the recurrence ----
    gi_all = jnp.dot(mlp, wih_ref[...],
                     preferred_element_type=jnp.float32) + bih_ref[...]  # (T*B, 3H)
    # Split gates once (off the critical path) and park them in VMEM scratch,
    # so the unrolled loop only does aligned, lane-offset-free loads.
    gi_r_scr[...] = gi_all[:, 0:H]
    gi_z_scr[...] = gi_all[:, H:2 * H]
    gi_n_scr[...] = gi_all[:, 2 * H:3 * H]

    whh_r = whh_r_ref[...]
    whh_z = whh_z_ref[...]
    whh_n = whh_n_ref[...]
    bhh_r = bhh_r_ref[...]
    bhh_z = bhh_z_ref[...]
    bhh_n = bhh_n_ref[...]

    # ---- Sequential GRU recurrence (PyTorch gate semantics), fully unrolled ----
    h = h0_ref[...]                                               # (B, H)
    hs = []
    for t in range(T):                                            # static unroll
        row = t * B                                               # static offset
        gi_r = gi_r_scr[row:row + B, :]
        gi_z = gi_z_scr[row:row + B, :]
        gi_n = gi_n_scr[row:row + B, :]
        gh_r = jnp.dot(h, whh_r, preferred_element_type=jnp.float32) + bhh_r
        gh_z = jnp.dot(h, whh_z, preferred_element_type=jnp.float32) + bhh_z
        gh_n = jnp.dot(h, whh_n, preferred_element_type=jnp.float32) + bhh_n
        r = jax.nn.sigmoid(gi_r + gh_r)
        z = jax.nn.sigmoid(gi_z + gh_z)
        n = jnp.tanh(gi_n + r * gh_n)
        h = (1.0 - z) * n + z * h                                 # keeps h-chain intact
        hs.append(h)

    # Single bulk store of all timesteps (no per-step masked stores).
    out_ref[...] = jnp.stack(hs, axis=0)                          # (T, B, H)


def basic_rnn_forward(x, h0, params):
    """x: (B, T, D_in) batch_first; h0: (num_layers=1, B, H). Returns dict like Basic_RNN."""
    B, T, Din = x.shape
    H = params["w_hh_t"].shape[0]

    # Time-major flatten done in XLA (contiguous relayout outside the kernel).
    x_flat = jnp.transpose(x, (1, 0, 2)).reshape(T * B, Din)
    h0_single = h0[0]                                             # (B, H)

    # Split the hidden-side GRU weights/biases per gate in the wrapper, so the
    # kernel's recurrence never slices at lane offsets.
    w_hh = params["w_hh_t"]                                       # (H, 3H) [r, z, n]
    b_hh = params["b_hh"]                                         # (1, 3H)
    whh_r, whh_z, whh_n = w_hh[:, 0:H], w_hh[:, H:2 * H], w_hh[:, 2 * H:3 * H]
    bhh_r, bhh_z, bhh_n = b_hh[:, 0:H], b_hh[:, H:2 * H], b_hh[:, 2 * H:3 * H]

    vmem = pl.BlockSpec(memory_space=pltpu.MemorySpace.VMEM)
    out_tm = pl.pallas_call(
        basic_rnn_kernel,
        out_shape=jax.ShapeDtypeStruct((T, B, H), jnp.float32),
        in_specs=[vmem] * 12,
        out_specs=vmem,
        scratch_shapes=[
            pltpu.VMEM((T * B, H), jnp.float32),   # gi_r
            pltpu.VMEM((T * B, H), jnp.float32),   # gi_z
            pltpu.VMEM((T * B, H), jnp.float32),   # gi_n
        ],
    )(
        x_flat, h0_single,
        params["w_mlp_t"], params["b_mlp"],
        params["w_ih_t"], params["b_ih"],
        whh_r, whh_z, whh_n,
        bhh_r, bhh_z, bhh_n,
    )

    state = jnp.transpose(out_tm, (1, 0, 2))                      # (B, T, H) batch_first
    hn = out_tm[T - 1][None]                                      # (1, B, H) == last step
    return {"state": state, "rnn_hidden": hn, "rnn_cell": None}


def reference_forward(x, h0, params):
    """Pure-JAX reference (same math) for correctness checking."""
    H = params["w_hh_t"].shape[0]
    mlp = jnp.maximum(jnp.einsum("btd,dh->bth", x, params["w_mlp_t"]) + params["b_mlp"], 0.0)

    def step(h, x_t):
        gi = x_t @ params["w_ih_t"] + params["b_ih"]
        gh = h @ params["w_hh_t"] + params["b_hh"]
        r = jax.nn.sigmoid(gi[:, 0:H] + gh[:, 0:H])
        z = jax.nn.sigmoid(gi[:, H:2 * H] + gh[:, H:2 * H])
        n = jnp.tanh(gi[:, 2 * H:3 * H] + r * gh[:, 2 * H:3 * H])
        h_new = (1.0 - z) * n + z * h
        return h_new, h_new

    hT, outs = lax.scan(step, h0[0], jnp.transpose(mlp, (1, 0, 2)))
    return jnp.transpose(outs, (1, 0, 2)), hT[None]


if __name__ == "__main__":
    # Small shapes consistent with Basic_RNN: batch=2, seq=8, obs_dim=16,
    # fc_hidden_sizes=[32], recurrent_hidden_size=32, 1 GRU layer.
    B, T, D_IN, H_MLP, H_RNN = 2, 8, 16, 32, 32

    key = jax.random.PRNGKey(0)
    k = jax.random.split(key, 8)

    params = {
        # Stored pre-transposed (in_dim, out_dim) so the kernel does x @ W.
        "w_mlp_t": jax.random.uniform(k[0], (D_IN, H_MLP), jnp.float32, -0.1, 0.1),
        "b_mlp":   jax.random.uniform(k[1], (1, H_MLP), jnp.float32, -0.05, 0.05),
        # GRU weights, gate order [r, z, n] like PyTorch nn.GRU.
        "w_ih_t":  jax.random.uniform(k[2], (H_MLP, 3 * H_RNN), jnp.float32, -0.1, 0.1),
        "b_ih":    jax.random.uniform(k[3], (1, 3 * H_RNN), jnp.float32, -0.05, 0.05),
        "w_hh_t":  jax.random.uniform(k[4], (H_RNN, 3 * H_RNN), jnp.float32, -0.1, 0.1),
        "b_hh":    jax.random.uniform(k[5], (1, 3 * H_RNN), jnp.float32, -0.05, 0.05),
    }

    x = jax.random.normal(k[6], (B, T, D_IN), jnp.float32)
    h0 = jnp.zeros((1, B, H_RNN), jnp.float32)  # Basic_RNN.init_hidden

    out = basic_rnn_forward(x, h0, params)
    jax.block_until_ready(out["state"])
    jax.block_until_ready(out["rnn_hidden"])

    # Sanity check against pure-JAX reference.
    ref_state, ref_hn = reference_forward(x, h0, params)
    assert jnp.allclose(out["state"], ref_state, atol=1e-5), "state mismatch"
    assert jnp.allclose(out["rnn_hidden"], ref_hn, atol=1e-5), "hidden mismatch"

    print("KERNEL_OK")
</pallas_src>

<mosaic_0001>
module attributes {stable_mosaic.version = 11 : i64} {
  func.func @basic_rnn_kernel(%arg0: memref<16x16xf32, #tpu.memory_space<vmem>>, %arg1: memref<2x32xf32, #tpu.memory_space<vmem>>, %arg2: memref<16x32xf32, #tpu.memory_space<vmem>>, %arg3: memref<1x32xf32, #tpu.memory_space<vmem>>, %arg4: memref<32x96xf32, #tpu.memory_space<vmem>>, %arg5: memref<1x96xf32, #tpu.memory_space<vmem>>, %arg6: memref<32x32xf32, #tpu.memory_space<vmem>>, %arg7: memref<32x32xf32, #tpu.memory_space<vmem>>, %arg8: memref<32x32xf32, #tpu.memory_space<vmem>>, %arg9: memref<1x32xf32, #tpu.memory_space<vmem>>, %arg10: memref<1x32xf32, #tpu.memory_space<vmem>>, %arg11: memref<1x32xf32, #tpu.memory_space<vmem>>, %arg12: memref<8x2x32xf32, #tpu.memory_space<vmem>>, %arg13: memref<16x32xf32, #tpu.memory_space<vmem>>, %arg14: memref<16x32xf32, #tpu.memory_space<vmem>>, %arg15: memref<16x32xf32, #tpu.memory_space<vmem>>) attributes {dimension_semantics = [], scalar_prefetch = 0 : i64, scratch_operands = 3 : i64, tpu.core_type = #tpu.core_type<tc>} {
    %c0 = arith.constant 0 : index
    %c0_0 = arith.constant 0 : index
    %0 = vector.load %arg0[%c0, %c0_0] : memref<16x16xf32, #tpu.memory_space<vmem>>, vector<16x16xf32>
    %c0_1 = arith.constant 0 : index
    %c0_2 = arith.constant 0 : index
    %1 = vector.load %arg2[%c0_1, %c0_2] : memref<16x32xf32, #tpu.memory_space<vmem>>, vector<16x32xf32>
    %cst = arith.constant dense<0.000000e+00> : vector<16x32xf32>
    %2 = tpu.matmul %0, %1, %cst {dimension_numbers = #tpu.dot_dimension_numbers<[1], [0], [0], [1], [0, 0, 1, 1], [], []>} : vector<16x16xf32>, vector<16x32xf32>, vector<16x32xf32> -> vector<16x32xf32>
    %c0_3 = arith.constant 0 : index
    %c0_4 = arith.constant 0 : index
    %3 = vector.load %arg3[%c0_3, %c0_4] : memref<1x32xf32, #tpu.memory_space<vmem>>, vector<1x32xf32>
    %4 = vector.broadcast %3 : vector<1x32xf32> to vector<16x32xf32>
    %5 = arith.addf %2, %4 : vector<16x32xf32>
    %cst_5 = arith.constant 0.000000e+00 : f32
    %6 = vector.broadcast %cst_5 : f32 to vector<16x32xf32>
    %7 = arith.maximumf %5, %6 : vector<16x32xf32>
    %c0_6 = arith.constant 0 : index
    %c0_7 = arith.constant 0 : index
    %8 = vector.load %arg4[%c0_6, %c0_7] : memref<32x96xf32, #tpu.memory_space<vmem>>, vector<32x96xf32>
    %cst_8 = arith.constant dense<0.000000e+00> : vector<16x96xf32>
    %9 = tpu.matmul %7, %8, %cst_8 {dimension_numbers = #tpu.dot_dimension_numbers<[1], [0], [0], [1], [0, 0, 1, 1], [], []>} : vector<16x32xf32>, vector<32x96xf32>, vector<16x96xf32> -> vector<16x96xf32>
    %c0_9 = arith.constant 0 : index
    %c0_10 = arith.constant 0 : index
    %10 = vector.load %arg5[%c0_9, %c0_10] : memref<1x96xf32, #tpu.memory_space<vmem>>, vector<1x96xf32>
    %11 = vector.broadcast %10 : vector<1x96xf32> to vector<16x96xf32>
    %12 = arith.addf %9, %11 : vector<16x96xf32>
    %13 = vector.extract_strided_slice %12 {offsets = [0, 0], sizes = [16, 32], strides = [1, 1]} : vector<16x96xf32> to vector<16x32xf32>
    %c0_11 = arith.constant 0 : index
    %c0_12 = arith.constant 0 : index
    %14 = vector.load %arg13[%c0_11, %c0_12] : memref<16x32xf32, #tpu.memory_space<vmem>>, vector<16x32xf32>
    tpu.vector_store %arg13[%c0_11, %c0_12], %13 {strides = array<i32>} : memref<16x32xf32, #tpu.memory_space<vmem>>, vector<16x32xf32>,
    %15 = vector.extract_strided_slice %12 {offsets = [0, 32], sizes = [16, 32], strides = [1, 1]} : vector<16x96xf32> to vector<16x32xf32>
    %c0_13 = arith.constant 0 : index
    %c0_14 = arith.constant 0 : index
    %16 = vector.load %arg14[%c0_13, %c0_14] : memref<16x32xf32, #tpu.memory_space<vmem>>, vector<16x32xf32>
    tpu.vector_store %arg14[%c0_13, %c0_14], %15 {strides = array<i32>} : memref<16x32xf32, #tpu.memory_space<vmem>>, vector<16x32xf32>,
    %17 = vector.extract_strided_slice %12 {offsets = [0, 64], sizes = [16, 32], strides = [1, 1]} : vector<16x96xf32> to vector<16x32xf32>
    %c0_15 = arith.constant 0 : index
    %c0_16 = arith.constant 0 : index
    %18 = vector.load %arg15[%c0_15, %c0_16] : memref<16x32xf32, #tpu.memory_space<vmem>>, vector<16x32xf32>
    tpu.vector_store %arg15[%c0_15, %c0_16], %17 {strides = array<i32>} : memref<16x32xf32, #tpu.memory_space<vmem>>, vector<16x32xf32>,
    %c0_17 = arith.constant 0 : index
    %c0_18 = arith.constant 0 : index
    %19 = vector.load %arg6[%c0_17, %c0_18] : memref<32x32xf32, #tpu.memory_space<vmem>>, vector<32x32xf32>
    %c0_19 = arith.constant 0 : index
    %c0_20 = arith.constant 0 : index
    %20 = vector.load %arg7[%c0_19, %c0_20] : memref<32x32xf32, #tpu.memory_space<vmem>>, vector<32x32xf32>
    %c0_21 = arith.constant 0 : index
    %c0_22 = arith.constant 0 : index
    %21 = vector.load %arg8[%c0_21, %c0_22] : memref<32x32xf32, #tpu.memory_space<vmem>>, vector<32x32xf32>
    %c0_23 = arith.constant 0 : index
    %c0_24 = arith.constant 0 : index
    %22 = vector.load %arg9[%c0_23, %c0_24] : memref<1x32xf32, #tpu.memory_space<vmem>>, vector<1x32xf32>
    %c0_25 = arith.constant 0 : index
    %c0_26 = arith.constant 0 : index
    %23 = vector.load %arg10[%c0_25, %c0_26] : memref<1x32xf32, #tpu.memory_space<vmem>>, vector<1x32xf32>
    %c0_27 = arith.constant 0 : index
    %c0_28 = arith.constant 0 : index
    %24 = vector.load %arg11[%c0_27, %c0_28] : memref<1x32xf32, #tpu.memory_space<vmem>>, vector<1x32xf32>
    %c0_29 = arith.constant 0 : index
    %c0_30 = arith.constant 0 : index
    %25 = vector.load %arg1[%c0_29, %c0_30] : memref<2x32xf32, #tpu.memory_space<vmem>>, vector<2x32xf32>
    %c0_31 = arith.constant 0 : index
    %c0_32 = arith.constant 0 : index
    %26 = vector.load %arg13[%c0_31, %c0_32] : memref<16x32xf32, #tpu.memory_space<vmem>>, vector<2x32xf32>
    %c0_33 = arith.constant 0 : index
    %c0_34 = arith.constant 0 : index
    %27 = vector.load %arg14[%c0_33, %c0_34] : memref<16x32xf32, #tpu.memory_space<vmem>>, vector<2x32xf32>
    %c0_35 = arith.constant 0 : index
    %c0_36 = arith.constant 0 : index
    %28 = vector.load %arg15[%c0_35, %c0_36] : memref<16x32xf32, #tpu.memory_space<vmem>>, vector<2x32xf32>
    %cst_37 = arith.constant dense<0.000000e+00> : vector<2x32xf32>
    %29 = tpu.matmul %25, %19, %cst_37 {dimension_numbers = #tpu.dot_dimension_numbers<[1], [0], [0], [1], [0, 0, 1, 1], [], []>} : vector<2x32xf32>, vector<32x32xf32>, vector<2x32xf32> -> vector<2x32xf32>
    %30 = vector.broadcast %22 : vector<1x32xf32> to vector<2x32xf32>
    %31 = arith.addf %29, %30 : vector<2x32xf32>
    %cst_38 = arith.constant dense<0.000000e+00> : vector<2x32xf32>
    %32 = tpu.matmul %25, %20, %cst_38 {dimension_numbers = #tpu.dot_dimension_numbers<[1], [0], [0], [1], [0, 0, 1, 1], [], []>} : vector<2x32xf32>, vector<32x32xf32>, vector<2x32xf32> -> vector<2x32xf32>
    %33 = vector.broadcast %23 : vector<1x32xf32> to vector<2x32xf32>
    %34 = arith.addf %32, %33 : vector<2x32xf32>
    %cst_39 = arith.constant dense<0.000000e+00> : vector<2x32xf32>
    %35 = tpu.matmul %25, %21, %cst_39 {dimension_numbers = #tpu.dot_dimension_numbers<[1], [0], [0], [1], [0, 0, 1, 1], [], []>} : vector<2x32xf32>, vector<32x32xf32>, vector<2x32xf32> -> vector<2x32xf32>
    %36 = vector.broadcast %24 : vector<1x32xf32> to vector<2x32xf32>
    %37 = arith.addf %35, %36 : vector<2x32xf32>
    %38 = arith.addf %26, %31 : vector<2x32xf32>
    %39 = arith.negf %38 : vector<2x32xf32>
    %40 = math.exp %39 : vector<2x32xf32>
    %cst_40 = arith.constant 1.000000e+00 : f32
    %41 = vector.broadcast %cst_40 : f32 to vector<2x32xf32>
    %42 = arith.addf %41, %40 : vector<2x32xf32>
    %43 = arith.divf %41, %42 : vector<2x32xf32>
    %44 = arith.addf %27, %34 : vector<2x32xf32>
    %45 = arith.negf %44 : vector<2x32xf32>
    %46 = math.exp %45 : vector<2x32xf32>
    %cst_41 = arith.constant 1.000000e+00 : f32
    %47 = vector.broadcast %cst_41 : f32 to vector<2x32xf32>
    %48 = arith.addf %47, %46 : vector<2x32xf32>
    %49 = arith.divf %47, %48 : vector<2x32xf32>
    %50 = arith.mulf %43, %37 : vector<2x32xf32>
    %51 = arith.addf %28, %50 : vector<2x32xf32>
    %52 = math.tanh %51 : vector<2x32xf32>
    %cst_42 = arith.constant 1.000000e+00 : f32
    %53 = vector.broadcast %cst_42 : f32 to vector<2x32xf32>
    %54 = arith.subf %53, %49 : vector<2x32xf32>
    %55 = arith.mulf %54, %52 : vector<2x32xf32>
    %56 = arith.mulf %49, %25 : vector<2x32xf32>
    %57 = arith.addf %55, %56 : vector<2x32xf32>
    %c2 = arith.constant 2 : index
    %c0_43 = arith.constant 0 : index
    %58 = vector.load %arg13[%c2, %c0_43] : memref<16x32xf32, #tpu.memory_space<vmem>>, vector<2x32xf32>
    %c2_44 = arith.constant 2 : index
    %c0_45 = arith.constant 0 : index
    %59 = vector.load %arg14[%c2_44, %c0_45] : memref<16x32xf32, #tpu.memory_space<vmem>>, vector<2x32xf32>
    %c2_46 = arith.constant 2 : index
    %c0_47 = arith.constant 0 : index
    %60 = vector.load %arg15[%c2_46, %c0_47] : memref<16x32xf32, #tpu.memory_space<vmem>>, vector<2x32xf32>
    %cst_48 = arith.constant dense<0.000000e+00> : vector<2x32xf32>
    %61 = tpu.matmul %57, %19, %cst_48 {dimension_numbers = #tpu.dot_dimension_numbers<[1], [0], [0], [1], [0, 0, 1, 1], [], []>} : vector<2x32xf32>, vector<32x32xf32>, vector<2x32xf32> -> vector<2x32xf32>
    %62 = vector.broadcast %22 : vector<1x32xf32> to vector<2x32xf32>
    %63 = arith.addf %61, %62 : vector<2x32xf32>
    %cst_49 = arith.constant dense<0.000000e+00> : vector<2x32xf32>
    %64 = tpu.matmul %57, %20, %cst_49 {dimension_numbers = #tpu.dot_dimension_numbers<[1], [0], [0], [1], [0, 0, 1, 1], [], []>} : vector<2x32xf32>, vector<32x32xf32>, vector<2x32xf32> -> vector<2x32xf32>
    %65 = vector.broadcast %23 : vector<1x32xf32> to vector<2x32xf32>
    %66 = arith.addf %64, %65 : vector<2x32xf32>
    %cst_50 = arith.constant dense<0.000000e+00> : vector<2x32xf32>
    %67 = tpu.matmul %57, %21, %cst_50 {dimension_numbers = #tpu.dot_dimension_numbers<[1], [0], [0], [1], [0, 0, 1, 1], [], []>} : vector<2x32xf32>, vector<32x32xf32>, vector<2x32xf32> -> vector<2x32xf32>
    %68 = vector.broadcast %24 : vector<1x32xf32> to vector<2x32xf32>
    %69 = arith.addf %67, %68 : vector<2x32xf32>
    %70 = arith.addf %58, %63 : vector<2x32xf32>
    %71 = arith.negf %70 : vector<2x32xf32>
    %72 = math.exp %71 : vector<2x32xf32>
    %cst_51 = arith.constant 1.000000e+00 : f32
    %73 = vector.broadcast %cst_51 : f32 to vector<2x32xf32>
    %74 = arith.addf %73, %72 : vector<2x32xf32>
    %75 = arith.divf %73, %74 : vector<2x32xf32>
    %76 = arith.addf %59, %66 : vector<2x32xf32>
    %77 = arith.negf %76 : vector<2x32xf32>
    %78 = math.exp %77 : vector<2x32xf32>
    %cst_52 = arith.constant 1.000000e+00 : f32
    %79 = vector.broadcast %cst_52 : f32 to vector<2x32xf32>
    %80 = arith.addf %79, %78 : vector<2x32xf32>
    %81 = arith.divf %79, %80 : vector<2x32xf32>
    %82 = arith.mulf %75, %69 : vector<2x32xf32>
    %83 = arith.addf %60, %82 : vector<2x32xf32>
    %84 = math.tanh %83 : vector<2x32xf32>
    %cst_53 = arith.constant 1.000000e+00 : f32
    %85 = vector.broadcast %cst_53 : f32 to vector<2x32xf32>
    %86 = arith.subf %85, %81 : vector<2x32xf32>
    %87 = arith.mulf %86, %84 : vector<2x32xf32>
    %88 = arith.mulf %81, %57 : vector<2x32xf32>
    %89 = arith.addf %87, %88 : vector<2x32xf32>
    %c4 = arith.constant 4 : index
    %c0_54 = arith.constant 0 : index
    %90 = vector.load %arg13[%c4, %c0_54] : memref<16x32xf32, #tpu.memory_space<vmem>>, vector<2x32xf32>
    %c4_55 = arith.constant 4 : index
    %c0_56 = arith.constant 0 : index
    %91 = vector.load %arg14[%c4_55, %c0_56] : memref<16x32xf32, #tpu.memory_space<vmem>>, vector<2x32xf32>
    %c4_57 = arith.constant 4 : index
    %c0_58 = arith.constant 0 : index
    %92 = vector.load %arg15[%c4_57, %c0_58] : memref<16x32xf32, #tpu.memory_space<vmem>>, vector<2x32xf32>
    %cst_59 = arith.constant dense<0.000000e+00> : vector<2x32xf32>
    %93 = tpu.matmul %89, %19, %cst_59 {dimension_numbers = #tpu.dot_dimension_numbers<[1], [0], [0], [1], [0, 0, 1, 1], [], []>} : vector<2x32xf32>, vector<32x32xf32>, vector<2x32xf32> -> vector<2x32xf32>
    %94 = vector.broadcast %22 : vector<1x32xf32> to vector<2x32xf32>
    %95 = arith.addf %93, %94 : vector<2x32xf32>
    %cst_60 = arith.constant dense<0.000000e+00> : vector<2x32xf32>
    %96 = tpu.matmul %89, %20, %cst_60 {dimension_numbers = #tpu.dot_dimension_numbers<[1], [0], [0], [1], [0, 0, 1, 1], [], []>} : vector<2x32xf32>, vector<32x32xf32>, vector<2x32xf32> -> vector<2x32xf32>
    %97 = vector.broadcast %23 : vector<1x32xf32> to vector<2x32xf32>
    %98 = arith.addf %96, %97 : vector<2x32xf32>
    %cst_61 = arith.constant dense<0.000000e+00> : vector<2x32xf32>
    %99 = tpu.matmul %89, %21, %cst_61 {dimension_numbers = #tpu.dot_dimension_numbers<[1], [0], [0], [1], [0, 0, 1, 1], [], []>} : vector<2x32xf32>, vector<32x32xf32>, vector<2x32xf32> -> vector<2x32xf32>
    %100 = vector.broadcast %24 : vector<1x32xf32> to vector<2x32xf32>
    %101 = arith.addf %99, %100 : vector<2x32xf32>
    %102 = arith.addf %90, %95 : vector<2x32xf32>
    %103 = arith.negf %102 : vector<2x32xf32>
    %104 = math.exp %103 : vector<2x32xf32>
    %cst_62 = arith.constant 1.000000e+00 : f32
    %105 = vector.broadcast %cst_62 : f32 to vector<2x32xf32>
    %106 = arith.addf %105, %104 : vector<2x32xf32>
    %107 = arith.divf %105, %106 : vector<2x32xf32>
    %108 = arith.addf %91, %98 : vector<2x32xf32>
    %109 = arith.negf %108 : vector<2x32xf32>
    %110 = math.exp %109 : vector<2x32xf32>
    %cst_63 = arith.constant 1.000000e+00 : f32
    %111 = vector.broadcast %cst_63 : f32 to vector<2x32xf32>
    %112 = arith.addf %111, %110 : vector<2x32xf32>
    %113 = arith.divf %111, %112 : vector<2x32xf32>
    %114 = arith.mulf %107, %101 : vector<2x32xf32>
    %115 = arith.addf %92, %114 : vector<2x32xf32>
    %116 = math.tanh %115 : vector<2x32xf32>
    %cst_64 = arith.constant 1.000000e+00 : f32
    %117 = vector.broadcast %cst_64 : f32 to vector<2x32xf32>
    %118 = arith.subf %117, %113 : vector<2x32xf32>
    %119 = arith.mulf %118, %116 : vector<2x32xf32>
    %120 = arith.mulf %113, %89 : vector<2x32xf32>
    %121 = arith.addf %119, %120 : vector<2x32xf32>
    %c6 = arith.constant 6 : index
    %c0_65 = arith.constant 0 : index
    %122 = vector.load %arg13[%c6, %c0_65] : memref<16x32xf32, #tpu.memory_space<vmem>>, vector<2x32xf32>
    %c6_66 = arith.constant 6 : index
    %c0_67 = arith.constant 0 : index
    %123 = vector.load %arg14[%c6_66, %c0_67] : memref<16x32xf32, #tpu.memory_space<vmem>>, vector<2x32xf32>
    %c6_68 = arith.constant 6 : index
    %c0_69 = arith.constant 0 : index
    %124 = vector.load %arg15[%c6_68, %c0_69] : memref<16x32xf32, #tpu.memory_space<vmem>>, vector<2x32xf32>
    %cst_70 = arith.constant dense<0.000000e+00> : vector<2x32xf32>
    %125 = tpu.matmul %121, %19, %cst_70 {dimension_numbers = #tpu.dot_dimension_numbers<[1], [0], [0], [1], [0, 0, 1, 1], [], []>} : vector<2x32xf32>, vector<32x32xf32>, vector<2x32xf32> -> vector<2x32xf32>
    %126 = vector.broadcast %22 : vector<1x32xf32> to vector<2x32xf32>
    %127 = arith.addf %125, %126 : vector<2x32xf32>
    %cst_71 = arith.constant dense<0.000000e+00> : vector<2x32xf32>
    %128 = tpu.matmul %121, %20, %cst_71 {dimension_numbers = #tpu.dot_dimension_numbers<[1], [0], [0], [1], [0, 0, 1, 1], [], []>} : vector<2x32xf32>, vector<32x32xf32>, vector<2x32xf32> -> vector<2x32xf32>
    %129 = vector.broadcast %23 : vector<1x32xf32> to vector<2x32xf32>
    %130 = arith.addf %128, %129 : vector<2x32xf32>
    %cst_72 = arith.constant dense<0.000000e+00> : vector<2x32xf32>
    %131 = tpu.matmul %121, %21, %cst_72 {dimension_numbers = #tpu.dot_dimension_numbers<[1], [0], [0], [1], [0, 0, 1, 1], [], []>} : vector<2x32xf32>, vector<32x32xf32>, vector<2x32xf32> -> vector<2x32xf32>
    %132 = vector.broadcast %24 : vector<1x32xf32> to vector<2x32xf32>
    %133 = arith.addf %131, %132 : vector<2x32xf32>
    %134 = arith.addf %122, %127 : vector<2x32xf32>
    %135 = arith.negf %134 : vector<2x32xf32>
    %136 = math.exp %135 : vector<2x32xf32>
    %cst_73 = arith.constant 1.000000e+00 : f32
    %137 = vector.broadcast %cst_73 : f32 to vector<2x32xf32>
    %138 = arith.addf %137, %136 : vector<2x32xf32>
    %139 = arith.divf %137, %138 : vector<2x32xf32>
    %140 = arith.addf %123, %130 : vector<2x32xf32>
    %141 = arith.negf %140 : vector<2x32xf32>
    %142 = math.exp %141 : vector<2x32xf32>
    %cst_74 = arith.constant 1.000000e+00 : f32
    %143 = vector.broadcast %cst_74 : f32 to vector<2x32xf32>
    %144 = arith.addf %143, %142 : vector<2x32xf32>
    %145 = arith.divf %143, %144 : vector<2x32xf32>
    %146 = arith.mulf %139, %133 : vector<2x32xf32>
    %147 = arith.addf %124, %146 : vector<2x32xf32>
    %148 = math.tanh %147 : vector<2x32xf32>
    %cst_75 = arith.constant 1.000000e+00 : f32
    %149 = vector.broadcast %cst_75 : f32 to vector<2x32xf32>
    %150 = arith.subf %149, %145 : vector<2x32xf32>
    %151 = arith.mulf %150, %148 : vector<2x32xf32>
    %152 = arith.mulf %145, %121 : vector<2x32xf32>
    %153 = arith.addf %151, %152 : vector<2x32xf32>
    %c8 = arith.constant 8 : index
    %c0_76 = arith.constant 0 : index
    %154 = vector.load %arg13[%c8, %c0_76] : memref<16x32xf32, #tpu.memory_space<vmem>>, vector<2x32xf32>
    %c8_77 = arith.constant 8 : index
    %c0_78 = arith.constant 0 : index
    %155 = vector.load %arg14[%c8_77, %c0_78] : memref<16x32xf32, #tpu.memory_space<vmem>>, vector<2x32xf32>
    %c8_79 = arith.constant 8 : index
    %c0_80 = arith.constant 0 : index
    %156 = vector.load %arg15[%c8_79, %c0_80] : memref<16x32xf32, #tpu.memory_space<vmem>>, vector<2x32xf32>
    %cst_81 = arith.constant dense<0.000000e+00> : vector<2x32xf32>
    %157 = tpu.matmul %153, %19, %cst_81 {dimension_numbers = #tpu.dot_dimension_numbers<[1], [0], [0], [1], [0, 0, 1, 1], [], []>} : vector<2x32xf32>, vector<32x32xf32>, vector<2x32xf32> -> vector<2x32xf32>
    %158 = vector.broadcast %22 : vector<1x32xf32> to vector<2x32xf32>
    %159 = arith.addf %157, %158 : vector<2x32xf32>
    %cst_82 = arith.constant dense<0.000000e+00> : vector<2x32xf32>
    %160 = tpu.matmul %153, %20, %cst_82 {dimension_numbers = #tpu.dot_dimension_numbers<[1], [0], [0], [1], [0, 0, 1, 1], [], []>} : vector<2x32xf32>, vector<32x32xf32>, vector<2x32xf32> -> vector<2x32xf32>
    %161 = vector.broadcast %23 : vector<1x32xf32> to vector<2x32xf32>
    %162 = arith.addf %160, %161 : vector<2x32xf32>
    %cst_83 = arith.constant dense<0.000000e+00> : vector<2x32xf32>
    %163 = tpu.matmul %153, %21, %cst_83 {dimension_numbers = #tpu.dot_dimension_numbers<[1], [0], [0], [1], [0, 0, 1, 1], [], []>} : vector<2x32xf32>, vector<32x32xf32>, vector<2x32xf32> -> vector<2x32xf32>
    %164 = vector.broadcast %24 : vector<1x32xf32> to vector<2x32xf32>
    %165 = arith.addf %163, %164 : vector<2x32xf32>
    %166 = arith.addf %154, %159 : vector<2x32xf32>
    %167 = arith.negf %166 : vector<2x32xf32>
    %168 = math.exp %167 : vector<2x32xf32>
    %cst_84 = arith.constant 1.000000e+00 : f32
    %169 = vector.broadcast %cst_84 : f32 to vector<2x32xf32>
    %170 = arith.addf %169, %168 : vector<2x32xf32>
    %171 = arith.divf %169, %170 : vector<2x32xf32>
    %172 = arith.addf %155, %162 : vector<2x32xf32>
    %173 = arith.negf %172 : vector<2x32xf32>
    %174 = math.exp %173 : vector<2x32xf32>
    %cst_85 = arith.constant 1.000000e+00 : f32
    %175 = vector.broadcast %cst_85 : f32 to vector<2x32xf32>
    %176 = arith.addf %175, %174 : vector<2x32xf32>
    %177 = arith.divf %175, %176 : vector<2x32xf32>
    %178 = arith.mulf %171, %165 : vector<2x32xf32>
    %179 = arith.addf %156, %178 : vector<2x32xf32>
    %180 = math.tanh %179 : vector<2x32xf32>
    %cst_86 = arith.constant 1.000000e+00 : f32
    %181 = vector.broadcast %cst_86 : f32 to vector<2x32xf32>
    %182 = arith.subf %181, %177 : vector<2x32xf32>
    %183 = arith.mulf %182, %180 : vector<2x32xf32>
    %184 = arith.mulf %177, %153 : vector<2x32xf32>
    %185 = arith.addf %183, %184 : vector<2x32xf32>
    %c10 = arith.constant 10 : index
    %c0_87 = arith.constant 0 : index
    %186 = vector.load %arg13[%c10, %c0_87] : memref<16x32xf32, #tpu.memory_space<vmem>>, vector<2x32xf32>
    %c10_88 = arith.constant 10 : index
    %c0_89 = arith.constant 0 : index
    %187 = vector.load %arg14[%c10_88, %c0_89] : memref<16x32xf32, #tpu.memory_space<vmem>>, vector<2x32xf32>
    %c10_90 = arith.constant 10 : index
    %c0_91 = arith.constant 0 : index
    %188 = vector.load %arg15[%c10_90, %c0_91] : memref<16x32xf32, #tpu.memory_space<vmem>>, vector<2x32xf32>
    %cst_92 = arith.constant dense<0.000000e+00> : vector<2x32xf32>
    %189 = tpu.matmul %185, %19, %cst_92 {dimension_numbers = #tpu.dot_dimension_numbers<[1], [0], [0], [1], [0, 0, 1, 1], [], []>} : vector<2x32xf32>, vector<32x32xf32>, vector<2x32xf32> -> vector<2x32xf32>
    %190 = vector.broadcast %22 : vector<1x32xf32> to vector<2x32xf32>
    %191 = arith.addf %189, %190 : vector<2x32xf32>
    %cst_93 = arith.constant dense<0.000000e+00> : vector<2x32xf32>
    %192 = tpu.matmul %185, %20, %cst_93 {dimension_numbers = #tpu.dot_dimension_numbers<[1], [0], [0], [1], [0, 0, 1, 1], [], []>} : vector<2x32xf32>, vector<32x32xf32>, vector<2x32xf32> -> vector<2x32xf32>
    %193 = vector.broadcast %23 : vector<1x32xf32> to vector<2x32xf32>
    %194 = arith.addf %192, %193 : vector<2x32xf32>
    %cst_94 = arith.constant dense<0.000000e+00> : vector<2x32xf32>
    %195 = tpu.matmul %185, %21, %cst_94 {dimension_numbers = #tpu.dot_dimension_numbers<[1], [0], [0], [1], [0, 0, 1, 1], [], []>} : vector<2x32xf32>, vector<32x32xf32>, vector<2x32xf32> -> vector<2x32xf32>
    %196 = vector.broadcast %24 : vector<1x32xf32> to vector<2x32xf32>
    %197 = arith.addf %195, %196 : vector<2x32xf32>
    %198 = arith.addf %186, %191 : vector<2x32xf32>
    %199 = arith.negf %198 : vector<2x32xf32>
    %200 = math.exp %199 : vector<2x32xf32>
    %cst_95 = arith.constant 1.000000e+00 : f32
    %201 = vector.broadcast %cst_95 : f32 to vector<2x32xf32>
    %202 = arith.addf %201, %200 : vector<2x32xf32>
    %203 = arith.divf %201, %202 : vector<2x32xf32>
    %204 = arith.addf %187, %194 : vector<2x32xf32>
    %205 = arith.negf %204 : vector<2x32xf32>
    %206 = math.exp %205 : vector<2x32xf32>
    %cst_96 = arith.constant 1.000000e+00 : f32
    %207 = vector.broadcast %cst_96 : f32 to vector<2x32xf32>
    %208 = arith.addf %207, %206 : vector<2x32xf32>
    %209 = arith.divf %207, %208 : vector<2x32xf32>
    %210 = arith.mulf %203, %197 : vector<2x32xf32>
    %211 = arith.addf %188, %210 : vector<2x32xf32>
    %212 = math.tanh %211 : vector<2x32xf32>
    %cst_97 = arith.constant 1.000000e+00 : f32
    %213 = vector.broadcast %cst_97 : f32 to vector<2x32xf32>
    %214 = arith.subf %213, %209 : vector<2x32xf32>
    %215 = arith.mulf %214, %212 : vector<2x32xf32>
    %216 = arith.mulf %209, %185 : vector<2x32xf32>
    %217 = arith.addf %215, %216 : vector<2x32xf32>
    %c12 = arith.constant 12 : index
    %c0_98 = arith.constant 0 : index
    %218 = vector.load %arg13[%c12, %c0_98] : memref<16x32xf32, #tpu.memory_space<vmem>>, vector<2x32xf32>
    %c12_99 = arith.constant 12 : index
    %c0_100 = arith.constant 0 : index
    %219 = vector.load %arg14[%c12_99, %c0_100] : memref<16x32xf32, #tpu.memory_space<vmem>>, vector<2x32xf32>
    %c12_101 = arith.constant 12 : index
    %c0_102 = arith.constant 0 : index
    %220 = vector.load %arg15[%c12_101, %c0_102] : memref<16x32xf32, #tpu.memory_space<vmem>>, vector<2x32xf32>
    %cst_103 = arith.constant dense<0.000000e+00> : vector<2x32xf32>
    %221 = tpu.matmul %217, %19, %cst_103 {dimension_numbers = #tpu.dot_dimension_numbers<[1], [0], [0], [1], [0, 0, 1, 1], [], []>} : vector<2x32xf32>, vector<32x32xf32>, vector<2x32xf32> -> vector<2x32xf32>
    %222 = vector.broadcast %22 : vector<1x32xf32> to vector<2x32xf32>
    %223 = arith.addf %221, %222 : vector<2x32xf32>
    %cst_104 = arith.constant dense<0.000000e+00> : vector<2x32xf32>
    %224 = tpu.matmul %217, %20, %cst_104 {dimension_numbers = #tpu.dot_dimension_numbers<[1], [0], [0], [1], [0, 0, 1, 1], [], []>} : vector<2x32xf32>, vector<32x32xf32>, vector<2x32xf32> -> vector<2x32xf32>
    %225 = vector.broadcast %23 : vector<1x32xf32> to vector<2x32xf32>
    %226 = arith.addf %224, %225 : vector<2x32xf32>
    %cst_105 = arith.constant dense<0.000000e+00> : vector<2x32xf32>
    %227 = tpu.matmul %217, %21, %cst_105 {dimension_numbers = #tpu.dot_dimension_numbers<[1], [0], [0], [1], [0, 0, 1, 1], [], []>} : vector<2x32xf32>, vector<32x32xf32>, vector<2x32xf32> -> vector<2x32xf32>
    %228 = vector.broadcast %24 : vector<1x32xf32> to vector<2x32xf32>
    %229 = arith.addf %227, %228 : vector<2x32xf32>
    %230 = arith.addf %218, %223 : vector<2x32xf32>
    %231 = arith.negf %230 : vector<2x32xf32>
    %232 = math.exp %231 : vector<2x32xf32>
    %cst_106 = arith.constant 1.000000e+00 : f32
    %233 = vector.broadcast %cst_106 : f32 to vector<2x32xf32>
    %234 = arith.addf %233, %232 : vector<2x32xf32>
    %235 = arith.divf %233, %234 : vector<2x32xf32>
    %236 = arith.addf %219, %226 : vector<2x32xf32>
    %237 = arith.negf %236 : vector<2x32xf32>
    %238 = math.exp %237 : vector<2x32xf32>
    %cst_107 = arith.constant 1.000000e+00 : f32
    %239 = vector.broadcast %cst_107 : f32 to vector<2x32xf32>
    %240 = arith.addf %239, %238 : vector<2x32xf32>
    %241 = arith.divf %239, %240 : vector<2x32xf32>
    %242 = arith.mulf %235, %229 : vector<2x32xf32>
    %243 = arith.addf %220, %242 : vector<2x32xf32>
    %244 = math.tanh %243 : vector<2x32xf32>
    %cst_108 = arith.constant 1.000000e+00 : f32
    %245 = vector.broadcast %cst_108 : f32 to vector<2x32xf32>
    %246 = arith.subf %245, %241 : vector<2x32xf32>
    %247 = arith.mulf %246, %244 : vector<2x32xf32>
    %248 = arith.mulf %241, %217 : vector<2x32xf32>
    %249 = arith.addf %247, %248 : vector<2x32xf32>
    %c14 = arith.constant 14 : index
    %c0_109 = arith.constant 0 : index
    %250 = vector.load %arg13[%c14, %c0_109] : memref<16x32xf32, #tpu.memory_space<vmem>>, vector<2x32xf32>
    %c14_110 = arith.constant 14 : index
    %c0_111 = arith.constant 0 : index
    %251 = vector.load %arg14[%c14_110, %c0_111] : memref<16x32xf32, #tpu.memory_space<vmem>>, vector<2x32xf32>
    %c14_112 = arith.constant 14 : index
    %c0_113 = arith.constant 0 : index
    %252 = vector.load %arg15[%c14_112, %c0_113] : memref<16x32xf32, #tpu.memory_space<vmem>>, vector<2x32xf32>
    %cst_114 = arith.constant dense<0.000000e+00> : vector<2x32xf32>
    %253 = tpu.matmul %249, %19, %cst_114 {dimension_numbers = #tpu.dot_dimension_numbers<[1], [0], [0], [1], [0, 0, 1, 1], [], []>} : vector<2x32xf32>, vector<32x32xf32>, vector<2x32xf32> -> vector<2x32xf32>
    %254 = vector.broadcast %22 : vector<1x32xf32> to vector<2x32xf32>
    %255 = arith.addf %253, %254 : vector<2x32xf32>
    %cst_115 = arith.constant dense<0.000000e+00> : vector<2x32xf32>
    %256 = tpu.matmul %249, %20, %cst_115 {dimension_numbers = #tpu.dot_dimension_numbers<[1], [0], [0], [1], [0, 0, 1, 1], [], []>} : vector<2x32xf32>, vector<32x32xf32>, vector<2x32xf32> -> vector<2x32xf32>
    %257 = vector.broadcast %23 : vector<1x32xf32> to vector<2x32xf32>
    %258 = arith.addf %256, %257 : vector<2x32xf32>
    %cst_116 = arith.constant dense<0.000000e+00> : vector<2x32xf32>
    %259 = tpu.matmul %249, %21, %cst_116 {dimension_numbers = #tpu.dot_dimension_numbers<[1], [0], [0], [1], [0, 0, 1, 1], [], []>} : vector<2x32xf32>, vector<32x32xf32>, vector<2x32xf32> -> vector<2x32xf32>
    %260 = vector.broadcast %24 : vector<1x32xf32> to vector<2x32xf32>
    %261 = arith.addf %259, %260 : vector<2x32xf32>
    %262 = arith.addf %250, %255 : vector<2x32xf32>
    %263 = arith.negf %262 : vector<2x32xf32>
    %264 = math.exp %263 : vector<2x32xf32>
    %cst_117 = arith.constant 1.000000e+00 : f32
    %265 = vector.broadcast %cst_117 : f32 to vector<2x32xf32>
    %266 = arith.addf %265, %264 : vector<2x32xf32>
    %267 = arith.divf %265, %266 : vector<2x32xf32>
    %268 = arith.addf %251, %258 : vector<2x32xf32>
    %269 = arith.negf %268 : vector<2x32xf32>
    %270 = math.exp %269 : vector<2x32xf32>
    %cst_118 = arith.constant 1.000000e+00 : f32
    %271 = vector.broadcast %cst_118 : f32 to vector<2x32xf32>
    %272 = arith.addf %271, %270 : vector<2x32xf32>
    %273 = arith.divf %271, %272 : vector<2x32xf32>
    %274 = arith.mulf %267, %261 : vector<2x32xf32>
    %275 = arith.addf %252, %274 : vector<2x32xf32>
    %276 = math.tanh %275 : vector<2x32xf32>
    %cst_119 = arith.constant 1.000000e+00 : f32
    %277 = vector.broadcast %cst_119 : f32 to vector<2x32xf32>
    %278 = arith.subf %277, %273 : vector<2x32xf32>
    %279 = arith.mulf %278, %276 : vector<2x32xf32>
    %280 = arith.mulf %273, %249 : vector<2x32xf32>
    %281 = arith.addf %279, %280 : vector<2x32xf32>
    %282 = vector.shape_cast %57 : vector<2x32xf32> to vector<1x2x32xf32>
    %283 = vector.shape_cast %89 : vector<2x32xf32> to vector<1x2x32xf32>
    %284 = vector.shape_cast %121 : vector<2x32xf32> to vector<1x2x32xf32>
    %285 = vector.shape_cast %153 : vector<2x32xf32> to vector<1x2x32xf32>
    %286 = vector.shape_cast %185 : vector<2x32xf32> to vector<1x2x32xf32>
    %287 = vector.shape_cast %217 : vector<2x32xf32> to vector<1x2x32xf32>
    %288 = vector.shape_cast %249 : vector<2x32xf32> to vector<1x2x32xf32>
    %289 = vector.shape_cast %281 : vector<2x32xf32> to vector<1x2x32xf32>
    %290 = tpu.concatenate %282, %283, %284, %285, %286, %287, %288, %289 in 0 : vector<1x2x32xf32>, vector<1x2x32xf32>, vector<1x2x32xf32>, vector<1x2x32xf32>, vector<1x2x32xf32>, vector<1x2x32xf32>, vector<1x2x32xf32>, vector<1x2x32xf32> -> vector<8x2x32xf32>
    %c0_120 = arith.constant 0 : index
    %c0_121 = arith.constant 0 : index
    %c0_122 = arith.constant 0 : index
    %291 = vector.load %arg12[%c0_120, %c0_121, %c0_122] : memref<8x2x32xf32, #tpu.memory_space<vmem>>, vector<8x2x32xf32>
    tpu.vector_store %arg12[%c0_120, %c0_121, %c0_122], %290 {strides = array<i32>} : memref<8x2x32xf32, #tpu.memory_space<vmem>>, vector<8x2x32xf32>,
    return
  }
}

</mosaic_0001>

<llo_original>
// kernel: tpu_custom_call.1
$region0: #{tpu_custom_call.1}
  #allocation0 [shape = 'u32[]', space=smem, size = 0x4, offset = 0x4, fixed_abs, tag = 'smem constant byte address 0x4 - core index']
  #allocation1 [shape = 'u32[144,128]{1,0:T(1,128)}', space=vmem, size = 0x12000, scoped, tag = 'internal scratch']
  #allocation2 [shape = 'f32[16,32]{1,0:T(8,128)}', space=vmem, size = 0x2000, scoped, tag = 'scratch operand']
  #allocation3 [shape = 'f32[16,32]{1,0:T(8,128)}', space=vmem, size = 0x2000, scoped, tag = 'scratch operand']
  #allocation4 [shape = 'f32[16,32]{1,0:T(8,128)}', space=vmem, size = 0x2000, scoped, tag = 'scratch operand']
  %s0 = inlined_call_operand.hbm [shape: f32[16,16], index: 0, kind: input, shape index: {}]
  %s1 = inlined_call_operand.hbm [shape: f32[2,32], index: 1, kind: input, shape index: {}]
  %s2 = inlined_call_operand.hbm [shape: f32[16,32], index: 2, kind: input, shape index: {}]
  %s3 = inlined_call_operand.vmem [shape: f32[1,32], index: 3, kind: input, shape index: {}]
  %s4 = inlined_call_operand.hbm [shape: f32[32,96], index: 4, kind: input, shape index: {}]
  %s5 = inlined_call_operand.vmem [shape: f32[1,96], index: 5, kind: input, shape index: {}]
  %s6 = inlined_call_operand.hbm [shape: f32[32,32], index: 6, kind: input, shape index: {}]
  %s7 = inlined_call_operand.hbm [shape: f32[32,32], index: 7, kind: input, shape index: {}]
  %s8 = inlined_call_operand.hbm [shape: f32[32,32], index: 8, kind: input, shape index: {}]
  %s9 = inlined_call_operand.vmem [shape: f32[1,32], index: 9, kind: input, shape index: {}]
  %s10 = inlined_call_operand.vmem [shape: f32[1,32], index: 10, kind: input, shape index: {}]
  %s11 = inlined_call_operand.vmem [shape: f32[1,32], index: 11, kind: input, shape index: {}]
  %s12 = inlined_call_operand.hbm [shape: f32[8,2,32], index: 12, kind: output, shape index: {}]
  %s13 = sld [smem:[#allocation0]]
  $region86: #{tpu_custom_call.1} parent=0
    _
  %s15 = ssub.s32 1, %s13
  %s16 = scalar_select 0, %s15, %s13
  $region1: #{tpu_custom_call.1} parent=0
    #allocation5 [shape = 'u8[8192]{0}', space=vmem, size = 0x2000, scoped, tag = 'input window, operand 0, single buffered']
    #allocation6 [shape = 's32[1]{0}', space=sflag, size = 0x4, scoped, tag = 'scoped memory for tpu_custom_call.1']
    #allocation7 [shape = 's32[1]{0}', space=sflag, size = 0x4, scoped, tag = 'scoped memory for tpu_custom_call.1']
    #allocation8 [shape = 'u8[1024]{0}', space=vmem, size = 0x400, scoped, tag = 'input window, operand 1, single buffered']
    #allocation9 [shape = 's32[1]{0}', space=sflag, size = 0x4, scoped, tag = 'scoped memory for tpu_custom_call.1']
    #allocation10 [shape = 'u8[8192]{0}', space=vmem, size = 0x2000, scoped, tag = 'input window, operand 2, single buffered']
    #allocation11 [shape = 'u8[16384]{0}', space=vmem, size = 0x4000, scoped, tag = 'input window, operand 4, single buffered']
    #allocation12 [shape = 's32[1]{0}', space=sflag, size = 0x4, scoped, tag = 'scoped memory for tpu_custom_call.1']
    #allocation13 [shape = 'u8[16384]{0}', space=vmem, size = 0x4000, scoped, tag = 'input window, operand 6, single buffered']
    #allocation14 [shape = 'u8[16384]{0}', space=vmem, size = 0x4000, scoped, tag = 'input window, operand 7, single buffered']
    #allocation15 [shape = 's32[1]{0}', space=sflag, size = 0x4, scoped, tag = 'scoped memory for tpu_custom_call.1']
    #allocation16 [shape = 'u8[16384]{0}', space=vmem, size = 0x4000, scoped, tag = 'input window, operand 8, single buffered']
    #allocation17 [shape = 'u8[8192]{0}', space=vmem, size = 0x2000, scoped, tag = 'output window, operand 0, single buffered']
    %17 = vsyncpa [#allocation6], 0
    %18 = vsyncpa [#allocation9], 0
    %19 = vsyncpa [#allocation12], 0
    %20 = vsyncpa [#allocation15], 0
    %21 = vsyncpa [#allocation7], 0
    // Predicated region
    $region2: #{tpu_custom_call.1} parent=1 // pred_check
      _
    $region3: #{tpu_custom_call.1} parent=1 // pred_check_branch
      %23 = sbr.rel (0) target = $region5
    $region4: #{tpu_custom_call.1} parent=1 // pred_region
      %s25 = ssub.s32 256, 256
      %26 = vsyncadd [#allocation6], %s25
      %s27 = sshll.u32 [#allocation5], 4
      %s28 = int_to_ptr.vmem [resolvable:$true] %s27
      %33 = dma.hbm_to_vmem [thread:$0]  %s0, 256, %s28, [#allocation6], 128, 128, 8
    $region5: #{tpu_custom_call.1} parent=1 // pred_fallthru
      _
    // Predicated region
    $region6: #{tpu_custom_call.1} parent=1 // pred_check
      _
    $region7: #{tpu_custom_call.1} parent=1 // pred_check_branch
      %35 = sbr.rel (0) target = $region9
    $region8: #{tpu_custom_call.1} parent=1 // pred_region
      %s37 = ssub.s32 32, 32
      %38 = vsyncadd [#allocation9], %s37
      %s40 = sshll.u32 [#allocation8], 4
      %s41 = int_to_ptr.vmem [resolvable:$true] %s40
      %43 = dma.hbm_to_vmem [thread:$0]  %s1, 32, %s41, [#allocation9]
    $region9: #{tpu_custom_call.1} parent=1 // pred_fallthru
      _
    // Predicated region
    $region10: #{tpu_custom_call.1} parent=1 // pred_check
      _
    $region11: #{tpu_custom_call.1} parent=1 // pred_check_branch
      %45 = sbr.rel (0) target = $region13
    $region12: #{tpu_custom_call.1} parent=1 // pred_region
      %s47 = ssub.s32 256, 256
      %48 = vsyncadd [#allocation9], %s47
      %s49 = sshll.u32 [#allocation10], 4
      %s50 = int_to_ptr.vmem [resolvable:$true] %s49
      %55 = dma.hbm_to_vmem [thread:$0]  %s2, 256, %s50, [#allocation9], 128, 128, 8
    $region13: #{tpu_custom_call.1} parent=1 // pred_fallthru
      _
    // Predicated region
    $region14: #{tpu_custom_call.1} parent=1 // pred_check
      _
    $region15: #{tpu_custom_call.1} parent=1 // pred_check_branch
      %57 = sbr.rel (0) target = $region17
    $region16: #{tpu_custom_call.1} parent=1 // pred_region
      _
    $region17: #{tpu_custom_call.1} parent=1 // pred_fallthru
      _
    // Predicated region
    $region18: #{tpu_custom_call.1} parent=1 // pred_check
      _
    $region19: #{tpu_custom_call.1} parent=1 // pred_check_branch
      %59 = sbr.rel (0) target = $region21
    $region20: #{tpu_custom_call.1} parent=1 // pred_region
      %s61 = ssub.s32 512, 512
      %62 = vsyncadd [#allocation12], %s61
      %s63 = sshll.u32 [#allocation11], 4
      %s64 = int_to_ptr.vmem [resolvable:$true] %s63
      %69 = dma.hbm_to_vmem [thread:$0]  %s4, 512, %s64, [#allocation12], 128, 128, 8
    $region21: #{tpu_custom_call.1} parent=1 // pred_fallthru
      _
    // Predicated region
    $region22: #{tpu_custom_call.1} parent=1 // pred_check
      _
    $region23: #{tpu_custom_call.1} parent=1 // pred_check_branch
      %71 = sbr.rel (0) target = $region25
    $region24: #{tpu_custom_call.1} parent=1 // pred_region
      _
    $region25: #{tpu_custom_call.1} parent=1 // pred_fallthru
      _
    // Predicated region
    $region26: #{tpu_custom_call.1} parent=1 // pred_check
      _
    $region27: #{tpu_custom_call.1} parent=1 // pred_check_branch
      %73 = sbr.rel (0) target = $region29
    $region28: #{tpu_custom_call.1} parent=1 // pred_region
      %s75 = ssub.s32 512, 512
      %76 = vsyncadd [#allocation12], %s75
      %s77 = sshll.u32 [#allocation13], 4
      %s78 = int_to_ptr.vmem [resolvable:$true] %s77
      %83 = dma.hbm_to_vmem [thread:$0]  %s6, 512, %s78, [#allocation12], 128, 128, 8
    $region29: #{tpu_custom_call.1} parent=1 // pred_fallthru
      _
    // Predicated region
    $region30: #{tpu_custom_call.1} parent=1 // pred_check
      _
    $region31: #{tpu_custom_call.1} parent=1 // pred_check_branch
      %85 = sbr.rel (0) target = $region33
    $region32: #{tpu_custom_call.1} parent=1 // pred_region
      %s87 = ssub.s32 512, 512
      %88 = vsyncadd [#allocation15], %s87
      %s89 = sshll.u32 [#allocation14], 4
      %s90 = int_to_ptr.vmem [resolvable:$true] %s89
      %95 = dma.hbm_to_vmem [thread:$0]  %s7, 512, %s90, [#allocation15], 128, 128, 8
    $region33: #{tpu_custom_call.1} parent=1 // pred_fallthru
      _
    // Predicated region
    $region34: #{tpu_custom_call.1} parent=1 // pred_check
      _
    $region35: #{tpu_custom_call.1} parent=1 // pred_check_branch
      %97 = sbr.rel (0) target = $region37
    $region36: #{tpu_custom_call.1} parent=1 // pred_region
      %s99 = ssub.s32 512, 512
      %100 = vsyncadd [#allocation15], %s99
      %s101 = sshll.u32 [#allocation16], 4
      %s102 = int_to_ptr.vmem [resolvable:$true] %s101
      %107 = dma.hbm_to_vmem [thread:$0]  %s8, 512, %s102, [#allocation15], 128, 128, 8
    $region37: #{tpu_custom_call.1} parent=1 // pred_fallthru
      _
    // Predicated region
    $region38: #{tpu_custom_call.1} parent=1 // pred_check
      _
    $region39: #{tpu_custom_call.1} parent=1 // pred_check_branch
      %109 = sbr.rel (0) target = $region41
    $region40: #{tpu_custom_call.1} parent=1 // pred_region
      _
    $region41: #{tpu_custom_call.1} parent=1 // pred_fallthru
      _
    // Predicated region
    $region42: #{tpu_custom_call.1} parent=1 // pred_check
      _
    $region43: #{tpu_custom_call.1} parent=1 // pred_check_branch
      %111 = sbr.rel (0) target = $region45
    $region44: #{tpu_custom_call.1} parent=1 // pred_region
      _
    $region45: #{tpu_custom_call.1} parent=1 // pred_fallthru
      _
    // Predicated region
    $region46: #{tpu_custom_call.1} parent=1 // pred_check
      _
    $region47: #{tpu_custom_call.1} parent=1 // pred_check_branch
      %113 = sbr.rel (0) target = $region49
    $region48: #{tpu_custom_call.1} parent=1 // pred_region
      _
    $region49: #{tpu_custom_call.1} parent=1 // pred_fallthru
      _
    // Predicated region
    $region50: #{tpu_custom_call.1} parent=1 // pred_check
      _
    $region51: #{tpu_custom_call.1} parent=1 // pred_check_branch
      %115 = sbr.rel (0) target = $region53
    $region52: #{tpu_custom_call.1} parent=1 // pred_region
      %116 = dma.done [#allocation6], 256
    $region53: #{tpu_custom_call.1} parent=1 // pred_fallthru
      _
    // Predicated region
    $region54: #{tpu_custom_call.1} parent=1 // pred_check
      _
    $region55: #{tpu_custom_call.1} parent=1 // pred_check_branch
      %118 = sbr.rel (0) target = $region57
    $region56: #{tpu_custom_call.1} parent=1 // pred_region
      %119 = dma.done [#allocation9], 32
    $region57: #{tpu_custom_call.1} parent=1 // pred_fallthru
      _
    // Predicated region
    $region58: #{tpu_custom_call.1} parent=1 // pred_check
      _
    $region59: #{tpu_custom_call.1} parent=1 // pred_check_branch
      %121 = sbr.rel (0) target = $region61
    $region60: #{tpu_custom_call.1} parent=1 // pred_region
      %122 = dma.done [#allocation9], 256
    $region61: #{tpu_custom_call.1} parent=1 // pred_fallthru
      _
    // Predicated region
    $region62: #{tpu_custom_call.1} parent=1 // pred_check
      _
    $region63: #{tpu_custom_call.1} parent=1 // pred_check_branch
      %124 = sbr.rel (0) target = $region65
    $region64: #{tpu_custom_call.1} parent=1 // pred_region
      %125 = dma.done [#allocation12], 512
    $region65: #{tpu_custom_call.1} parent=1 // pred_fallthru
      _
    // Predicated region
    $region66: #{tpu_custom_call.1} parent=1 // pred_check
      _
    $region67: #{tpu_custom_call.1} parent=1 // pred_check_branch
      %127 = sbr.rel (0) target = $region69
    $region68: #{tpu_custom_call.1} parent=1 // pred_region
      %128 = dma.done [#allocation12], 512
    $region69: #{tpu_custom_call.1} parent=1 // pred_fallthru
      _
    // Predicated region
    $region70: #{tpu_custom_call.1} parent=1 // pred_check
      _
    $region71: #{tpu_custom_call.1} parent=1 // pred_check_branch
      %130 = sbr.rel (0) target = $region73
    $region72: #{tpu_custom_call.1} parent=1 // pred_region
      %131 = dma.done [#allocation15], 512
    $region73: #{tpu_custom_call.1} parent=1 // pred_fallthru
      _
    // Predicated region
    $region74: #{tpu_custom_call.1} parent=1 // pred_check
      _
    $region75: #{tpu_custom_call.1} parent=1 // pred_check_branch
      %133 = sbr.rel (0) target = $region77
    $region76: #{tpu_custom_call.1} parent=1 // pred_region
      %134 = dma.done [#allocation15], 512
    $region77: #{tpu_custom_call.1} parent=1 // pred_fallthru
      _
    %v135 = vld [vmem:[#allocation5] sm:$0xff]
    %v136 = vld [vmem:[#allocation5 + $0x8] sm:$0xff]
    %v137 = vld [vmem:[#allocation10] sm:$0xff]
    %v138 = vld [vmem:[#allocation10 + $0x8] sm:$0xff]
    %v139 = vld [vmem:[%s3] sm:$0x1]
    %v141 = vlaneseq
    %v142 = vshrl.u32 %v141, 7
    %v143 = vsub.s32 0, %v142
    %v144 = vrot.slane %v139, %v143
    %vm146 = vcmask 130048
    %v148 = vsel %vm146, %v135, 0
    %v151 = vsel %vm146, %v136, 0
    %153 = vmatprep.subr.mxu0 0.0
    %154 = vmatpush1.msra.mxu0 0.0
    %155 = vmatprep.subr.mxu0 0.0
    %156 = vmatpush1.msra.mxu0 0.0
    %157 = vmatprep.subr.mxu0 0.0
    %158 = vmatpush1.msra.mxu0 0.0
    %159 = vmatprep.subr.mxu0 0.0
    %160 = vmatpush1.msra.mxu0 0.0
    %161 = vmatprep.subr.mxu0 0.0
    %162 = vmatpush1.msra.mxu0 0.0
    %163 = vmatprep.subr.mxu0 0.0
    %164 = vmatpush1.msra.mxu0 0.0
    %165 = vmatprep.subr.mxu0 0.0
    %166 = vmatpush1.msra.mxu0 0.0
    %167 = vmatprep.subr.mxu0 0.0
    %168 = vmatpush1.msra.mxu0 0.0
    %169 = vmatprep.subr.mxu0 0.0
    %170 = vmatpush1.msra.mxu0 0.0
    %171 = vmatprep.subr.mxu0 0.0
    %172 = vmatpush1.msra.mxu0 0.0
    %173 = vmatprep.subr.mxu0 0.0
    %174 = vmatpush1.msra.mxu0 0.0
    %175 = vmatprep.subr.mxu0 0.0
    %176 = vmatpush1.msra.mxu0 0.0
    %177 = vmatprep.subr.mxu0 0.0
    %178 = vmatpush1.msra.mxu0 0.0
    %179 = vmatprep.subr.mxu0 0.0
    %180 = vmatpush1.msra.mxu0 0.0
    %181 = vmatprep.subr.mxu0 0.0
    %182 = vmatpush1.msra.mxu0 %v138
    %183 = vmatprep.subr.mxu0 0.0
    %184 = vmatpush1.msra.mxu0 %v137
    %185 = vmatprep.subr.mxu0 0.0
    %186 = vmatpush2.msra.mxu0 0.0
    %187 = vmatprep.subr.mxu0 0.0
    %188 = vmatpush2.msra.mxu0 0.0
    %189 = vmatprep.subr.mxu0 0.0
    %190 = vmatpush2.msra.mxu0 0.0
    %191 = vmatprep.subr.mxu0 0.0
    %192 = vmatpush2.msra.mxu0 0.0
    %193 = vmatprep.subr.mxu0 0.0
    %194 = vmatpush2.msra.mxu0 0.0
    %195 = vmatprep.subr.mxu0 0.0
    %196 = vmatpush2.msra.mxu0 0.0
    %197 = vmatprep.subr.mxu0 0.0
    %198 = vmatpush2.msra.mxu0 0.0
    %199 = vmatprep.subr.mxu0 0.0
    %200 = vmatpush2.msra.mxu0 0.0
    %201 = vmatprep.subr.mxu0 0.0
    %202 = vmatpush2.msra.mxu0 0.0
    %203 = vmatprep.subr.mxu0 0.0
    %204 = vmatpush2.msra.mxu0 0.0
    %205 = vmatprep.subr.mxu0 0.0
    %206 = vmatpush2.msra.mxu0 0.0
    %207 = vmatprep.subr.mxu0 0.0
    %208 = vmatpush2.msra.mxu0 0.0
    %209 = vmatprep.subr.mxu0 0.0
    %210 = vmatpush2.msra.mxu0 0.0
    %211 = vmatprep.subr.mxu0 0.0
    %212 = vmatpush2.msra.mxu0 0.0
    %213 = vmatprep.subr.mxu0 0.0
    %214 = vmatpush2.msra.mxu0 0.0
    %215 = vmatprep.subr.mxu0 0.0
    %216 = vmatpush2.msra.mxu0 0.0
    %217 = vmatprep.mubr.f32.mxu0 0.0
    %218 = vmatmul.mubr.f32.gmra.mxu0 %v148
    %v219 = vpop.f32.mrf.mxu0
    %v220 = vadd.f32 %v144, %v219
    %v221 = vpop.f32.mrf.mxu0
    %222 = vmatprep.mubr.f32.mxu0 0.0
    %223 = vmatmul.mubr.f32.gmra.mxu0 %v151
    %v224 = vpop.f32.mrf.mxu0
    %v225 = vadd.f32 %v144, %v224
    %v226 = vpop.f32.mrf.mxu0
    %227 = vdwg.mxu0
    %v228 = vmax.f32 %v220, 0.0
    %v229 = vmax.f32 %v225, 0.0
    %v230 = vld [vmem:[#allocation11] sm:$0xff]
    %v231 = vld [vmem:[#allocation11 + $0x8] sm:$0xff]
    %v232 = vld [vmem:[#allocation11 + $0x10] sm:$0xff]
    %v233 = vld [vmem:[#allocation11 + $0x18] sm:$0xff]
    %v234 = vld [vmem:[%s5] sm:$0x1]
    %v236 = vlaneseq
    %v237 = vshrl.u32 %v236, 7
    %v238 = vsub.s32 0, %v237
    %v239 = vrot.slane %v234, %v238
    %vm241 = vcmask 261120
    %v243 = vsel %vm241, %v228, 0
    %v246 = vsel %vm241, %v229, 0
    %248 = vmatprep.subr.mxu0 0.0
    %249 = vmatpush1.msra.mxu0 0.0
    %250 = vmatprep.subr.mxu0 0.0
    %251 = vmatpush1.msra.mxu0 0.0
    %252 = vmatprep.subr.mxu0 0.0
    %253 = vmatpush1.msra.mxu0 0.0
    %254 = vmatprep.subr.mxu0 0.0
    %255 = vmatpush1.msra.mxu0 0.0
    %256 = vmatprep.subr.mxu0 0.0
    %257 = vmatpush1.msra.mxu0 0.0
    %258 = vmatprep.subr.mxu0 0.0
    %259 = vmatpush1.msra.mxu0 0.0
    %260 = vmatprep.subr.mxu0 0.0
    %261 = vmatpush1.msra.mxu0 0.0
    %262 = vmatprep.subr.mxu0 0.0
    %263 = vmatpush1.msra.mxu0 0.0
    %264 = vmatprep.subr.mxu0 0.0
    %265 = vmatpush1.msra.mxu0 0.0
    %266 = vmatprep.subr.mxu0 0.0
    %267 = vmatpush1.msra.mxu0 0.0
    %268 = vmatprep.subr.mxu0 0.0
    %269 = vmatpush1.msra.mxu0 0.0
    %270 = vmatprep.subr.mxu0 0.0
    %271 = vmatpush1.msra.mxu0 0.0
    %272 = vmatprep.subr.mxu0 0.0
    %273 = vmatpush1.msra.mxu0 %v233
    %274 = vmatprep.subr.mxu0 0.0
    %275 = vmatpush1.msra.mxu0 %v232
    %276 = vmatprep.subr.mxu0 0.0
    %277 = vmatpush1.msra.mxu0 %v231
    %278 = vmatprep.subr.mxu0 0.0
    %279 = vmatpush1.msra.mxu0 %v230
    %280 = vmatprep.subr.mxu0 0.0
    %281 = vmatpush2.msra.mxu0 0.0
    %282 = vmatprep.subr.mxu0 0.0
    %283 = vmatpush2.msra.mxu0 0.0
    %284 = vmatprep.subr.mxu0 0.0
    %285 = vmatpush2.msra.mxu0 0.0
    %286 = vmatprep.subr.mxu0 0.0
    %287 = vmatpush2.msra.mxu0 0.0
    %288 = vmatprep.subr.mxu0 0.0
    %289 = vmatpush2.msra.mxu0 0.0
    %290 = vmatprep.subr.mxu0 0.0
    %291 = vmatpush2.msra.mxu0 0.0
    %292 = vmatprep.subr.mxu0 0.0
    %293 = vmatpush2.msra.mxu0 0.0
    %294 = vmatprep.subr.mxu0 0.0
    %295 = vmatpush2.msra.mxu0 0.0
    %296 = vmatprep.subr.mxu0 0.0
    %297 = vmatpush2.msra.mxu0 0.0
    %298 = vmatprep.subr.mxu0 0.0
    %299 = vmatpush2.msra.mxu0 0.0
    %300 = vmatprep.subr.mxu0 0.0
    %301 = vmatpush2.msra.mxu0 0.0
    %302 = vmatprep.subr.mxu0 0.0
    %303 = vmatpush2.msra.mxu0 0.0
    %304 = vmatprep.subr.mxu0 0.0
    %305 = vmatpush2.msra.mxu0 0.0
    %306 = vmatprep.subr.mxu0 0.0
    %307 = vmatpush2.msra.mxu0 0.0
    %308 = vmatprep.subr.mxu0 0.0
    %309 = vmatpush2.msra.mxu0 0.0
    %310 = vmatprep.subr.mxu0 0.0
    %311 = vmatpush2.msra.mxu0 0.0
    %312 = vmatprep.mubr.f32.mxu0 0.0
    %313 = vmatmul.mubr.f32.gmra.mxu0 %v243
    %v314 = vpop.f32.mrf.mxu0
    %v315 = vadd.f32 %v239, %v314
    %v316 = vpop.f32.mrf.mxu0
    %317 = vmatprep.mubr.f32.mxu0 0.0
    %318 = vmatmul.mubr.f32.gmra.mxu0 %v246
    %v319 = vpop.f32.mrf.mxu0
    %v320 = vadd.f32 %v239, %v319
    %v321 = vpop.f32.mrf.mxu0
    %322 = vdwg.mxu0
    %323 = vst.msk [vmem:[#allocation2] sm:$0xff] %vm241, %v315
    %324 = vst.msk [vmem:[#allocation2 + $0x8] sm:$0xff] %vm241, %v320
    %327 = vrot.lane.b32.xlu0 %v315, 96
    %v328 = vpop.permute.xlu0 %327
    %329 = vrot.lane.b32.xlu0 %v320, 96
    %v330 = vpop.permute.xlu0 %329
    %333 = vst.msk [vmem:[#allocation3] sm:$0xff] %vm241, %v328
    %334 = vst.msk [vmem:[#allocation3 + $0x8] sm:$0xff] %vm241, %v330
    %335 = vrot.lane.b32.xlu0 %v315, 64
    %v336 = vpop.permute.xlu0 %335
    %337 = vrot.lane.b32.xlu0 %v320, 64
    %v338 = vpop.permute.xlu0 %337
    %341 = vst.msk [vmem:[#allocation4] sm:$0xff] %vm241, %v336
    %342 = vst.msk [vmem:[#allocation4 + $0x8] sm:$0xff] %vm241, %v338
    %v343 = vld [vmem:[#allocation13] sm:$0xff]
    %v344 = vld [vmem:[#allocation13 + $0x8] sm:$0xff]
    %v345 = vld [vmem:[#allocation13 + $0x10] sm:$0xff]
    %v346 = vld [vmem:[#allocation13 + $0x18] sm:$0xff]
    %v347 = vld [vmem:[#allocation14] sm:$0xff]
    %v348 = vld [vmem:[#allocation14 + $0x8] sm:$0xff]
    %v349 = vld [vmem:[#allocation14 + $0x10] sm:$0xff]
    %v350 = vld [vmem:[#allocation14 + $0x18] sm:$0xff]
    %v351 = vld [vmem:[#allocation16] sm:$0xff]
    %v352 = vld [vmem:[#allocation16 + $0x8] sm:$0xff]
    %v353 = vld [vmem:[#allocation16 + $0x10] sm:$0xff]
    %v354 = vld [vmem:[#allocation16 + $0x18] sm:$0xff]
    %v355 = vld [vmem:[%s9] sm:$0x1]
    %v356 = vld [vmem:[%s10] sm:$0x1]
    %v357 = vld [vmem:[%s11] sm:$0x1]
    %v358 = vld [vmem:[#allocation8] sm:$0x3]
    %v359 = vld [vmem:[#allocation2] sm:$0x3]
    %v360 = vld [vmem:[#allocation3] sm:$0x3]
    %v361 = vld [vmem:[#allocation4] sm:$0x3]
    %v363 = vlaneseq
    %v364 = vshrl.u32 %v363, 7
    %v365 = vsub.s32 0, %v364
    %v366 = vrot.slane %v355, %v365
    %v369 = vsel %vm241, %v358, 0
    %371 = vmatprep.subr.mxu0 0.0
    %372 = vmatpush1.msra.mxu0 0.0
    %373 = vmatprep.subr.mxu0 0.0
    %374 = vmatpush1.msra.mxu0 0.0
    %375 = vmatprep.subr.mxu0 0.0
    %376 = vmatpush1.msra.mxu0 0.0
    %377 = vmatprep.subr.mxu0 0.0
    %378 = vmatpush1.msra.mxu0 0.0
    %379 = vmatprep.subr.mxu0 0.0
    %380 = vmatpush1.msra.mxu0 0.0
    %381 = vmatprep.subr.mxu0 0.0
    %382 = vmatpush1.msra.mxu0 0.0
    %383 = vmatprep.subr.mxu0 0.0
    %384 = vmatpush1.msra.mxu0 0.0
    %385 = vmatprep.subr.mxu0 0.0
    %386 = vmatpush1.msra.mxu0 0.0
    %387 = vmatprep.subr.mxu0 0.0
    %388 = vmatpush1.msra.mxu0 0.0
    %389 = vmatprep.subr.mxu0 0.0
    %390 = vmatpush1.msra.mxu0 0.0
    %391 = vmatprep.subr.mxu0 0.0
    %392 = vmatpush1.msra.mxu0 0.0
    %393 = vmatprep.subr.mxu0 0.0
    %394 = vmatpush1.msra.mxu0 0.0
    %395 = vmatprep.subr.mxu0 0.0
    %396 = vmatpush1.msra.mxu0 %v346
    %397 = vmatprep.subr.mxu0 0.0
    %398 = vmatpush1.msra.mxu0 %v345
    %399 = vmatprep.subr.mxu0 0.0
    %400 = vmatpush1.msra.mxu0 %v344
    %401 = vmatprep.subr.mxu0 0.0
    %402 = vmatpush1.msra.mxu0 %v343
    %403 = vmatprep.subr.mxu0 0.0
    %404 = vmatpush2.msra.mxu0 0.0
    %405 = vmatprep.subr.mxu0 0.0
    %406 = vmatpush2.msra.mxu0 0.0
    %407 = vmatprep.subr.mxu0 0.0
    %408 = vmatpush2.msra.mxu0 0.0
    %409 = vmatprep.subr.mxu0 0.0
    %410 = vmatpush2.msra.mxu0 0.0
    %411 = vmatprep.subr.mxu0 0.0
    %412 = vmatpush2.msra.mxu0 0.0
    %413 = vmatprep.subr.mxu0 0.0
    %414 = vmatpush2.msra.mxu0 0.0
    %415 = vmatprep.subr.mxu0 0.0
    %416 = vmatpush2.msra.mxu0 0.0
    %417 = vmatprep.subr.mxu0 0.0
    %418 = vmatpush2.msra.mxu0 0.0
    %419 = vmatprep.subr.mxu0 0.0
    %420 = vmatpush2.msra.mxu0 0.0
    %421 = vmatprep.subr.mxu0 0.0
    %422 = vmatpush2.msra.mxu0 0.0
    %423 = vmatprep.subr.mxu0 0.0
    %424 = vmatpush2.msra.mxu0 0.0
    %425 = vmatprep.subr.mxu0 0.0
    %426 = vmatpush2.msra.mxu0 0.0
    %427 = vmatprep.subr.mxu0 0.0
    %428 = vmatpush2.msra.mxu0 0.0
    %429 = vmatprep.subr.mxu0 0.0
    %430 = vmatpush2.msra.mxu0 0.0
    %431 = vmatprep.subr.mxu0 0.0
    %432 = vmatpush2.msra.mxu0 0.0
    %433 = vmatprep.subr.mxu0 0.0
    %434 = vmatpush2.msra.mxu0 0.0
    %435 = vmatprep.mubr.f32.mxu0 0.0
    %436 = vmatmul.mubr.f32.gmra.mxu0 %v369
    %v437 = vpop.f32.mrf.mxu0
    %v438 = vadd.f32 %v366, %v437
    %v439 = vpop.f32.mrf.mxu0
    %440 = vdwg.mxu0
    %v442 = vlaneseq
    %v443 = vshrl.u32 %v442, 7
    %v444 = vsub.s32 0, %v443
    %v445 = vrot.slane %v356, %v444
    %447 = vmatprep.subr.mxu0 0.0
    %448 = vmatpush1.msra.mxu0 0.0
    %449 = vmatprep.subr.mxu0 0.0
    %450 = vmatpush1.msra.mxu0 0.0
    %451 = vmatprep.subr.mxu0 0.0
    %452 = vmatpush1.msra.mxu0 0.0
    %453 = vmatprep.subr.mxu0 0.0
    %454 = vmatpush1.msra.mxu0 0.0
    %455 = vmatprep.subr.mxu0 0.0
    %456 = vmatpush1.msra.mxu0 0.0
    %457 = vmatprep.subr.mxu0 0.0
    %458 = vmatpush1.msra.mxu0 0.0
    %459 = vmatprep.subr.mxu0 0.0
    %460 = vmatpush1.msra.mxu0 0.0
    %461 = vmatprep.subr.mxu0 0.0
    %462 = vmatpush1.msra.mxu0 0.0
    %463 = vmatprep.subr.mxu0 0.0
    %464 = vmatpush1.msra.mxu0 0.0
    %465 = vmatprep.subr.mxu0 0.0
    %466 = vmatpush1.msra.mxu0 0.0
    %467 = vmatprep.subr.mxu0 0.0
    %468 = vmatpush1.msra.mxu0 0.0
    %469 = vmatprep.subr.mxu0 0.0
    %470 = vmatpush1.msra.mxu0 0.0
    %471 = vmatprep.subr.mxu0 0.0
    %472 = vmatpush1.msra.mxu0 %v350
    %473 = vmatprep.subr.mxu0 0.0
    %474 = vmatpush1.msra.mxu0 %v349
    %475 = vmatprep.subr.mxu0 0.0
    %476 = vmatpush1.msra.mxu0 %v348
    %477 = vmatprep.subr.mxu0 0.0
    %478 = vmatpush1.msra.mxu0 %v347
    %479 = vmatprep.subr.mxu0 0.0
    %480 = vmatpush2.msra.mxu0 0.0
    %481 = vmatprep.subr.mxu0 0.0
    %482 = vmatpush2.msra.mxu0 0.0
    %483 = vmatprep.subr.mxu0 0.0
    %484 = vmatpush2.msra.mxu0 0.0
    %485 = vmatprep.subr.mxu0 0.0
    %486 = vmatpush2.msra.mxu0 0.0
    %487 = vmatprep.subr.mxu0 0.0
    %488 = vmatpush2.msra.mxu0 0.0
    %489 = vmatprep.subr.mxu0 0.0
    %490 = vmatpush2.msra.mxu0 0.0
    %491 = vmatprep.subr.mxu0 0.0
    %492 = vmatpush2.msra.mxu0 0.0
    %493 = vmatprep.subr.mxu0 0.0
    %494 = vmatpush2.msra.mxu0 0.0
    %495 = vmatprep.subr.mxu0 0.0
    %496 = vmatpush2.msra.mxu0 0.0
    %497 = vmatprep.subr.mxu0 0.0
    %498 = vmatpush2.msra.mxu0 0.0
    %499 = vmatprep.subr.mxu0 0.0
    %500 = vmatpush2.msra.mxu0 0.0
    %501 = vmatprep.subr.mxu0 0.0
    %502 = vmatpush2.msra.mxu0 0.0
    %503 = vmatprep.subr.mxu0 0.0
    %504 = vmatpush2.msra.mxu0 0.0
    %505 = vmatprep.subr.mxu0 0.0
    %506 = vmatpush2.msra.mxu0 0.0
    %507 = vmatprep.subr.mxu0 0.0
    %508 = vmatpush2.msra.mxu0 0.0
    %509 = vmatprep.subr.mxu0 0.0
    %510 = vmatpush2.msra.mxu0 0.0
    %511 = vmatprep.mubr.f32.mxu0 0.0
    %512 = vmatmul.mubr.f32.gmra.mxu0 %v369
    %v513 = vpop.f32.mrf.mxu0
    %v514 = vadd.f32 %v445, %v513
    %v515 = vpop.f32.mrf.mxu0
    %516 = vdwg.mxu0
    %v518 = vlaneseq
    %v519 = vshrl.u32 %v518, 7
    %v520 = vsub.s32 0, %v519
    %v521 = vrot.slane %v357, %v520
    %523 = vmatprep.subr.mxu0 0.0
    %524 = vmatpush1.msra.mxu0 0.0
    %525 = vmatprep.subr.mxu0 0.0
    %526 = vmatpush1.msra.mxu0 0.0
    %527 = vmatprep.subr.mxu0 0.0
    %528 = vmatpush1.msra.mxu0 0.0
    %529 = vmatprep.subr.mxu0 0.0
    %530 = vmatpush1.msra.mxu0 0.0
    %531 = vmatprep.subr.mxu0 0.0
    %532 = vmatpush1.msra.mxu0 0.0
    %533 = vmatprep.subr.mxu0 0.0
    %534 = vmatpush1.msra.mxu0 0.0
    %535 = vmatprep.subr.mxu0 0.0
    %536 = vmatpush1.msra.mxu0 0.0
    %537 = vmatprep.subr.mxu0 0.0
    %538 = vmatpush1.msra.mxu0 0.0
    %539 = vmatprep.subr.mxu0 0.0
    %540 = vmatpush1.msra.mxu0 0.0
    %541 = vmatprep.subr.mxu0 0.0
    %542 = vmatpush1.msra.mxu0 0.0
    %543 = vmatprep.subr.mxu0 0.0
    %544 = vmatpush1.msra.mxu0 0.0
    %545 = vmatprep.subr.mxu0 0.0
    %546 = vmatpush1.msra.mxu0 0.0
    %547 = vmatprep.subr.mxu0 0.0
    %548 = vmatpush1.msra.mxu0 %v354
    %549 = vmatprep.subr.mxu0 0.0
    %550 = vmatpush1.msra.mxu0 %v353
    %551 = vmatprep.subr.mxu0 0.0
    %552 = vmatpush1.msra.mxu0 %v352
    %553 = vmatprep.subr.mxu0 0.0
    %554 = vmatpush1.msra.mxu0 %v351
    %555 = vmatprep.subr.mxu0 0.0
    %556 = vmatpush2.msra.mxu0 0.0
    %557 = vmatprep.subr.mxu0 0.0
    %558 = vmatpush2.msra.mxu0 0.0
    %559 = vmatprep.subr.mxu0 0.0
    %560 = vmatpush2.msra.mxu0 0.0
    %561 = vmatprep.subr.mxu0 0.0
    %562 = vmatpush2.msra.mxu0 0.0
    %563 = vmatprep.subr.mxu0 0.0
    %564 = vmatpush2.msra.mxu0 0.0
    %565 = vmatprep.subr.mxu0 0.0
    %566 = vmatpush2.msra.mxu0 0.0
    %567 = vmatprep.subr.mxu0 0.0
    %568 = vmatpush2.msra.mxu0 0.0
    %569 = vmatprep.subr.mxu0 0.0
    %570 = vmatpush2.msra.mxu0 0.0
    %571 = vmatprep.subr.mxu0 0.0
    %572 = vmatpush2.msra.mxu0 0.0
    %573 = vmatprep.subr.mxu0 0.0
    %574 = vmatpush2.msra.mxu0 0.0
    %575 = vmatprep.subr.mxu0 0.0
    %576 = vmatpush2.msra.mxu0 0.0
    %577 = vmatprep.subr.mxu0 0.0
    %578 = vmatpush2.msra.mxu0 0.0
    %579 = vmatprep.subr.mxu0 0.0
    %580 = vmatpush2.msra.mxu0 0.0
    %581 = vmatprep.subr.mxu0 0.0
    %582 = vmatpush2.msra.mxu0 0.0
    %583 = vmatprep.subr.mxu0 0.0
    %584 = vmatpush2.msra.mxu0 0.0
    %585 = vmatprep.subr.mxu0 0.0
    %586 = vmatpush2.msra.mxu0 0.0
    %587 = vmatprep.mubr.f32.mxu0 0.0
    %588 = vmatmul.mubr.f32.gmra.mxu0 %v369
    %v589 = vpop.f32.mrf.mxu0
    %v590 = vadd.f32 %v521, %v589
    %v591 = vpop.f32.mrf.mxu0
    %592 = vdwg.mxu0
    %v593 = vadd.f32 %v359, %v438
    %v594 = vxor.u32 %v593, 2147483648
    %v595 = vmul.f32 %v594, 1.442695
    %v596 = vpow.pop %v595
    %v597 = vadd.f32 %v596, 1.0
    %v598 = vrcp.pop %v597
    %v599 = vmul.f32 1.0, %v598
    %v600 = vadd.f32 %v360, %v514
    %v601 = vxor.u32 %v600, 2147483648
    %v602 = vmul.f32 %v601, 1.442695
    %v603 = vpow.pop %v602
    %v604 = vadd.f32 %v603, 1.0
    %v605 = vrcp.pop %v604
    %v606 = vmul.f32 1.0, %v605
    %v607 = vmul.f32 %v599, %v590
    %v608 = vadd.f32 %v361, %v607
    %v609 = vtanh.pop %v608
    %v610 = vsub.f32 1.0, %v606
    %v611 = vmul.f32 %v610, %v609
    %v612 = vmul.f32 %v606, %v358
    %v613 = vadd.f32 %v611, %v612
    %v614 = vld [vmem:[#allocation2 + $0x2] sm:$0x3]
    %v615 = vld [vmem:[#allocation3 + $0x2] sm:$0x3]
    %v616 = vld [vmem:[#allocation4 + $0x2] sm:$0x3]
    %v618 = vsel %vm241, %v613, 0
    %620 = vmatprep.subr.mxu0 0.0
    %621 = vmatpush1.msra.mxu0 0.0
    %622 = vmatprep.subr.mxu0 0.0
    %623 = vmatpush1.msra.mxu0 0.0
    %624 = vmatprep.subr.mxu0 0.0
    %625 = vmatpush1.msra.mxu0 0.0
    %626 = vmatprep.subr.mxu0 0.0
    %627 = vmatpush1.msra.mxu0 0.0
    %628 = vmatprep.subr.mxu0 0.0
    %629 = vmatpush1.msra.mxu0 0.0
    %630 = vmatprep.subr.mxu0 0.0
    %631 = vmatpush1.msra.mxu0 0.0
    %632 = vmatprep.subr.mxu0 0.0
    %633 = vmatpush1.msra.mxu0 0.0
    %634 = vmatprep.subr.mxu0 0.0
    %635 = vmatpush1.msra.mxu0 0.0
    %636 = vmatprep.subr.mxu0 0.0
    %637 = vmatpush1.msra.mxu0 0.0
    %638 = vmatprep.subr.mxu0 0.0
    %639 = vmatpush1.msra.mxu0 0.0
    %640 = vmatprep.subr.mxu0 0.0
    %641 = vmatpush1.msra.mxu0 0.0
    %642 = vmatprep.subr.mxu0 0.0
    %643 = vmatpush1.msra.mxu0 0.0
    %644 = vmatprep.subr.mxu0 0.0
    %645 = vmatpush1.msra.mxu0 %v346
    %646 = vmatprep.subr.mxu0 0.0
    %647 = vmatpush1.msra.mxu0 %v345
    %648 = vmatprep.subr.mxu0 0.0
    %649 = vmatpush1.msra.mxu0 %v344
    %650 = vmatprep.subr.mxu0 0.0
    %651 = vmatpush1.msra.mxu0 %v343
    %652 = vmatprep.subr.mxu0 0.0
    %653 = vmatpush2.msra.mxu0 0.0
    %654 = vmatprep.subr.mxu0 0.0
    %655 = vmatpush2.msra.mxu0 0.0
    %656 = vmatprep.subr.mxu0 0.0
    %657 = vmatpush2.msra.mxu0 0.0
    %658 = vmatprep.subr.mxu0 0.0
    %659 = vmatpush2.msra.mxu0 0.0
    %660 = vmatprep.subr.mxu0 0.0
    %661 = vmatpush2.msra.mxu0 0.0
    %662 = vmatprep.subr.mxu0 0.0
    %663 = vmatpush2.msra.mxu0 0.0
    %664 = vmatprep.subr.mxu0 0.0
    %665 = vmatpush2.msra.mxu0 0.0
    %666 = vmatprep.subr.mxu0 0.0
    %667 = vmatpush2.msra.mxu0 0.0
    %668 = vmatprep.subr.mxu0 0.0
    %669 = vmatpush2.msra.mxu0 0.0
    %670 = vmatprep.subr.mxu0 0.0
    %671 = vmatpush2.msra.mxu0 0.0
    %672 = vmatprep.subr.mxu0 0.0
    %673 = vmatpush2.msra.mxu0 0.0
    %674 = vmatprep.subr.mxu0 0.0
    %675 = vmatpush2.msra.mxu0 0.0
    %676 = vmatprep.subr.mxu0 0.0
    %677 = vmatpush2.msra.mxu0 0.0
    %678 = vmatprep.subr.mxu0 0.0
    %679 = vmatpush2.msra.mxu0 0.0
    %680 = vmatprep.subr.mxu0 0.0
    %681 = vmatpush2.msra.mxu0 0.0
    %682 = vmatprep.subr.mxu0 0.0
    %683 = vmatpush2.msra.mxu0 0.0
    %684 = vmatprep.mubr.f32.mxu0 0.0
    %685 = vmatmul.mubr.f32.gmra.mxu0 %v618
    %v686 = vpop.f32.mrf.mxu0
    %v687 = vadd.f32 %v366, %v686
    %v688 = vpop.f32.mrf.mxu0
    %689 = vdwg.mxu0
    %690 = vmatprep.subr.mxu0 0.0
    %691 = vmatpush1.msra.mxu0 0.0
    %692 = vmatprep.subr.mxu0 0.0
    %693 = vmatpush1.msra.mxu0 0.0
    %694 = vmatprep.subr.mxu0 0.0
    %695 = vmatpush1.msra.mxu0 0.0
    %696 = vmatprep.subr.mxu0 0.0
    %697 = vmatpush1.msra.mxu0 0.0
    %698 = vmatprep.subr.mxu0 0.0
    %699 = vmatpush1.msra.mxu0 0.0
    %700 = vmatprep.subr.mxu0 0.0
    %701 = vmatpush1.msra.mxu0 0.0
    %702 = vmatprep.subr.mxu0 0.0
    %703 = vmatpush1.msra.mxu0 0.0
    %704 = vmatprep.subr.mxu0 0.0
    %705 = vmatpush1.msra.mxu0 0.0
    %706 = vmatprep.subr.mxu0 0.0
    %707 = vmatpush1.msra.mxu0 0.0
    %708 = vmatprep.subr.mxu0 0.0
    %709 = vmatpush1.msra.mxu0 0.0
    %710 = vmatprep.subr.mxu0 0.0
    %711 = vmatpush1.msra.mxu0 0.0
    %712 = vmatprep.subr.mxu0 0.0
    %713 = vmatpush1.msra.mxu0 0.0
    %714 = vmatprep.subr.mxu0 0.0
    %715 = vmatpush1.msra.mxu0 %v350
    %716 = vmatprep.subr.mxu0 0.0
    %717 = vmatpush1.msra.mxu0 %v349
    %718 = vmatprep.subr.mxu0 0.0
    %719 = vmatpush1.msra.mxu0 %v348
    %720 = vmatprep.subr.mxu0 0.0
    %721 = vmatpush1.msra.mxu0 %v347
    %722 = vmatprep.subr.mxu0 0.0
    %723 = vmatpush2.msra.mxu0 0.0
    %724 = vmatprep.subr.mxu0 0.0
    %725 = vmatpush2.msra.mxu0 0.0
    %726 = vmatprep.subr.mxu0 0.0
    %727 = vmatpush2.msra.mxu0 0.0
    %728 = vmatprep.subr.mxu0 0.0
    %729 = vmatpush2.msra.mxu0 0.0
    %730 = vmatprep.subr.mxu0 0.0
    %731 = vmatpush2.msra.mxu0 0.0
    %732 = vmatprep.subr.mxu0 0.0
    %733 = vmatpush2.msra.mxu0 0.0
    %734 = vmatprep.subr.mxu0 0.0
    %735 = vmatpush2.msra.mxu0 0.0
    %736 = vmatprep.subr.mxu0 0.0
    %737 = vmatpush2.msra.mxu0 0.0
    %738 = vmatprep.subr.mxu0 0.0
    %739 = vmatpush2.msra.mxu0 0.0
    %740 = vmatprep.subr.mxu0 0.0
    %741 = vmatpush2.msra.mxu0 0.0
    %742 = vmatprep.subr.mxu0 0.0
    %743 = vmatpush2.msra.mxu0 0.0
    %744 = vmatprep.subr.mxu0 0.0
    %745 = vmatpush2.msra.mxu0 0.0
    %746 = vmatprep.subr.mxu0 0.0
    %747 = vmatpush2.msra.mxu0 0.0
    %748 = vmatprep.subr.mxu0 0.0
    %749 = vmatpush2.msra.mxu0 0.0
    %750 = vmatprep.subr.mxu0 0.0
    %751 = vmatpush2.msra.mxu0 0.0
    %752 = vmatprep.subr.mxu0 0.0
    %753 = vmatpush2.msra.mxu0 0.0
    %754 = vmatprep.mubr.f32.mxu0 0.0
    %755 = vmatmul.mubr.f32.gmra.mxu0 %v618
    %v756 = vpop.f32.mrf.mxu0
    %v757 = vadd.f32 %v445, %v756
    %v758 = vpop.f32.mrf.mxu0
    %759 = vdwg.mxu0
    %760 = vmatprep.subr.mxu0 0.0
    %761 = vmatpush1.msra.mxu0 0.0
    %762 = vmatprep.subr.mxu0 0.0
    %763 = vmatpush1.msra.mxu0 0.0
    %764 = vmatprep.subr.mxu0 0.0
    %765 = vmatpush1.msra.mxu0 0.0
    %766 = vmatprep.subr.mxu0 0.0
    %767 = vmatpush1.msra.mxu0 0.0
    %768 = vmatprep.subr.mxu0 0.0
    %769 = vmatpush1.msra.mxu0 0.0
    %770 = vmatprep.subr.mxu0 0.0
    %771 = vmatpush1.msra.mxu0 0.0
    %772 = vmatprep.subr.mxu0 0.0
    %773 = vmatpush1.msra.mxu0 0.0
    %774 = vmatprep.subr.mxu0 0.0
    %775 = vmatpush1.msra.mxu0 0.0
    %776 = vmatprep.subr.mxu0 0.0
    %777 = vmatpush1.msra.mxu0 0.0
    %778 = vmatprep.subr.mxu0 0.0
    %779 = vmatpush1.msra.mxu0 0.0
    %780 = vmatprep.subr.mxu0 0.0
    %781 = vmatpush1.msra.mxu0 0.0
    %782 = vmatprep.subr.mxu0 0.0
    %783 = vmatpush1.msra.mxu0 0.0
    %784 = vmatprep.subr.mxu0 0.0
    %785 = vmatpush1.msra.mxu0 %v354
    %786 = vmatprep.subr.mxu0 0.0
    %787 = vmatpush1.msra.mxu0 %v353
    %788 = vmatprep.subr.mxu0 0.0
    %789 = vmatpush1.msra.mxu0 %v352
    %790 = vmatprep.subr.mxu0 0.0
    %791 = vmatpush1.msra.mxu0 %v351
    %792 = vmatprep.subr.mxu0 0.0
    %793 = vmatpush2.msra.mxu0 0.0
    %794 = vmatprep.subr.mxu0 0.0
    %795 = vmatpush2.msra.mxu0 0.0
    %796 = vmatprep.subr.mxu0 0.0
    %797 = vmatpush2.msra.mxu0 0.0
    %798 = vmatprep.subr.mxu0 0.0
    %799 = vmatpush2.msra.mxu0 0.0
    %800 = vmatprep.subr.mxu0 0.0
    %801 = vmatpush2.msra.mxu0 0.0
    %802 = vmatprep.subr.mxu0 0.0
    %803 = vmatpush2.msra.mxu0 0.0
    %804 = vmatprep.subr.mxu0 0.0
    %805 = vmatpush2.msra.mxu0 0.0
    %806 = vmatprep.subr.mxu0 0.0
    %807 = vmatpush2.msra.mxu0 0.0
    %808 = vmatprep.subr.mxu0 0.0
    %809 = vmatpush2.msra.mxu0 0.0
    %810 = vmatprep.subr.mxu0 0.0
    %811 = vmatpush2.msra.mxu0 0.0
    %812 = vmatprep.subr.mxu0 0.0
    %813 = vmatpush2.msra.mxu0 0.0
    %814 = vmatprep.subr.mxu0 0.0
    %815 = vmatpush2.msra.mxu0 0.0
    %816 = vmatprep.subr.mxu0 0.0
    %817 = vmatpush2.msra.mxu0 0.0
    %818 = vmatprep.subr.mxu0 0.0
    %819 = vmatpush2.msra.mxu0 0.0
    %820 = vmatprep.subr.mxu0 0.0
    %821 = vmatpush2.msra.mxu0 0.0
    %822 = vmatprep.subr.mxu0 0.0
    %823 = vmatpush2.msra.mxu0 0.0
    %824 = vmatprep.mubr.f32.mxu0 0.0
    %825 = vmatmul.mubr.f32.gmra.mxu0 %v618
    %v826 = vpop.f32.mrf.mxu0
    %v827 = vadd.f32 %v521, %v826
    %v828 = vpop.f32.mrf.mxu0
    %829 = vdwg.mxu0
    %v830 = vadd.f32 %v614, %v687
    %v831 = vxor.u32 %v830, 2147483648
    %v832 = vmul.f32 %v831, 1.442695
    %v833 = vpow.pop %v832
    %v834 = vadd.f32 %v833, 1.0
    %v835 = vrcp.pop %v834
    %v836 = vmul.f32 1.0, %v835
    %v837 = vadd.f32 %v615, %v757
    %v838 = vxor.u32 %v837, 2147483648
    %v839 = vmul.f32 %v838, 1.442695
    %v840 = vpow.pop %v839
    %v841 = vadd.f32 %v840, 1.0
    %v842 = vrcp.pop %v841
    %v843 = vmul.f32 1.0, %v842
    %v844 = vmul.f32 %v836, %v827
    %v845 = vadd.f32 %v616, %v844
    %v846 = vtanh.pop %v845
    %v847 = vsub.f32 1.0, %v843
    %v848 = vmul.f32 %v847, %v846
    %v849 = vmul.f32 %v843, %v613
    %v850 = vadd.f32 %v848, %v849
    %v851 = vld [vmem:[#allocation2 + $0x4] sm:$0x3]
    %v852 = vld [vmem:[#allocation3 + $0x4] sm:$0x3]
    %v853 = vld [vmem:[#allocation4 + $0x4] sm:$0x3]
    %v855 = vsel %vm241, %v850, 0
    %857 = vmatprep.subr.mxu0 0.0
    %858 = vmatpush1.msra.mxu0 0.0
    %859 = vmatprep.subr.mxu0 0.0
    %860 = vmatpush1.msra.mxu0 0.0
    %861 = vmatprep.subr.mxu0 0.0
    %862 = vmatpush1.msra.mxu0 0.0
    %863 = vmatprep.subr.mxu0 0.0
    %864 = vmatpush1.msra.mxu0 0.0
    %865 = vmatprep.subr.mxu0 0.0
    %866 = vmatpush1.msra.mxu0 0.0
    %867 = vmatprep.subr.mxu0 0.0
    %868 = vmatpush1.msra.mxu0 0.0
    %869 = vmatprep.subr.mxu0 0.0
    %870 = vmatpush1.msra.mxu0 0.0
    %871 = vmatprep.subr.mxu0 0.0
    %872 = vmatpush1.msra.mxu0 0.0
    %873 = vmatprep.subr.mxu0 0.0
    %874 = vmatpush1.msra.mxu0 0.0
    %875 = vmatprep.subr.mxu0 0.0
    %876 = vmatpush1.msra.mxu0 0.0
    %877 = vmatprep.subr.mxu0 0.0
    %878 = vmatpush1.msra.mxu0 0.0
    %879 = vmatprep.subr.mxu0 0.0
    %880 = vmatpush1.msra.mxu0 0.0
    %881 = vmatprep.subr.mxu0 0.0
    %882 = vmatpush1.msra.mxu0 %v346
    %883 = vmatprep.subr.mxu0 0.0
    %884 = vmatpush1.msra.mxu0 %v345
    %885 = vmatprep.subr.mxu0 0.0
    %886 = vmatpush1.msra.mxu0 %v344
    %887 = vmatprep.subr.mxu0 0.0
    %888 = vmatpush1.msra.mxu0 %v343
    %889 = vmatprep.subr.mxu0 0.0
    %890 = vmatpush2.msra.mxu0 0.0
    %891 = vmatprep.subr.mxu0 0.0
    %892 = vmatpush2.msra.mxu0 0.0
    %893 = vmatprep.subr.mxu0 0.0
    %894 = vmatpush2.msra.mxu0 0.0
    %895 = vmatprep.subr.mxu0 0.0
    %896 = vmatpush2.msra.mxu0 0.0
    %897 = vmatprep.subr.mxu0 0.0
    %898 = vmatpush2.msra.mxu0 0.0
    %899 = vmatprep.subr.mxu0 0.0
    %900 = vmatpush2.msra.mxu0 0.0
    %901 = vmatprep.subr.mxu0 0.0
    %902 = vmatpush2.msra.mxu0 0.0
    %903 = vmatprep.subr.mxu0 0.0
    %904 = vmatpush2.msra.mxu0 0.0
    %905 = vmatprep.subr.mxu0 0.0
    %906 = vmatpush2.msra.mxu0 0.0
    %907 = vmatprep.subr.mxu0 0.0
    %908 = vmatpush2.msra.mxu0 0.0
    %909 = vmatprep.subr.mxu0 0.0
    %910 = vmatpush2.msra.mxu0 0.0
    %911 = vmatprep.subr.mxu0 0.0
    %912 = vmatpush2.msra.mxu0 0.0
    %913 = vmatprep.subr.mxu0 0.0
    %914 = vmatpush2.msra.mxu0 0.0
    %915 = vmatprep.subr.mxu0 0.0
    %916 = vmatpush2.msra.mxu0 0.0
    %917 = vmatprep.subr.mxu0 0.0
    %918 = vmatpush2.msra.mxu0 0.0
    %919 = vmatprep.subr.mxu0 0.0
    %920 = vmatpush2.msra.mxu0 0.0
    %921 = vmatprep.mubr.f32.mxu0 0.0
    %922 = vmatmul.mubr.f32.gmra.mxu0 %v855
    %v923 = vpop.f32.mrf.mxu0
    %v924 = vadd.f32 %v366, %v923
    %v925 = vpop.f32.mrf.mxu0
    %926 = vdwg.mxu0
    %927 = vmatprep.subr.mxu0 0.0
    %928 = vmatpush1.msra.mxu0 0.0
    %929 = vmatprep.subr.mxu0 0.0
    %930 = vmatpush1.msra.mxu0 0.0
    %931 = vmatprep.subr.mxu0 0.0
    %932 = vmatpush1.msra.mxu0 0.0
    %933 = vmatprep.subr.mxu0 0.0
    %934 = vmatpush1.msra.mxu0 0.0
    %935 = vmatprep.subr.mxu0 0.0
    %936 = vmatpush1.msra.mxu0 0.0
    %937 = vmatprep.subr.mxu0 0.0
    %938 = vmatpush1.msra.mxu0 0.0
    %939 = vmatprep.subr.mxu0 0.0
    %940 = vmatpush1.msra.mxu0 0.0
    %941 = vmatprep.subr.mxu0 0.0
    %942 = vmatpush1.msra.mxu0 0.0
    %943 = vmatprep.subr.mxu0 0.0
    %944 = vmatpush1.msra.mxu0 0.0
    %945 = vmatprep.subr.mxu0 0.0
    %946 = vmatpush1.msra.mxu0 0.0
    %947 = vmatprep.subr.mxu0 0.0
    %948 = vmatpush1.msra.mxu0 0.0
    %949 = vmatprep.subr.mxu0 0.0
    %950 = vmatpush1.msra.mxu0 0.0
    %951 = vmatprep.subr.mxu0 0.0
    %952 = vmatpush1.msra.mxu0 %v350
    %953 = vmatprep.subr.mxu0 0.0
    %954 = vmatpush1.msra.mxu0 %v349
    %955 = vmatprep.subr.mxu0 0.0
    %956 = vmatpush1.msra.mxu0 %v348
    %957 = vmatprep.subr.mxu0 0.0
    %958 = vmatpush1.msra.mxu0 %v347
    %959 = vmatprep.subr.mxu0 0.0
    %960 = vmatpush2.msra.mxu0 0.0
    %961 = vmatprep.subr.mxu0 0.0
    %962 = vmatpush2.msra.mxu0 0.0
    %963 = vmatprep.subr.mxu0 0.0
    %964 = vmatpush2.msra.mxu0 0.0
    %965 = vmatprep.subr.mxu0 0.0
    %966 = vmatpush2.msra.mxu0 0.0
    %967 = vmatprep.subr.mxu0 0.0
    %968 = vmatpush2.msra.mxu0 0.0
    %969 = vmatprep.subr.mxu0 0.0
    %970 = vmatpush2.msra.mxu0 0.0
    %971 = vmatprep.subr.mxu0 0.0
    %972 = vmatpush2.msra.mxu0 0.0
    %973 = vmatprep.subr.mxu0 0.0
    %974 = vmatpush2.msra.mxu0 0.0
    %975 = vmatprep.subr.mxu0 0.0
    %976 = vmatpush2.msra.mxu0 0.0
    %977 = vmatprep.subr.mxu0 0.0
    %978 = vmatpush2.msra.mxu0 0.0
    %979 = vmatprep.subr.mxu0 0.0
    %980 = vmatpush2.msra.mxu0 0.0
    %981 = vmatprep.subr.mxu0 0.0
    %982 = vmatpush2.msra.mxu0 0.0
    %983 = vmatprep.subr.mxu0 0.0
    %984 = vmatpush2.msra.mxu0 0.0
    %985 = vmatprep.subr.mxu0 0.0
    %986 = vmatpush2.msra.mxu0 0.0
    %987 = vmatprep.subr.mxu0 0.0
    %988 = vmatpush2.msra.mxu0 0.0
    %989 = vmatprep.subr.mxu0 0.0
    %990 = vmatpush2.msra.mxu0 0.0
    %991 = vmatprep.mubr.f32.mxu0 0.0
    %992 = vmatmul.mubr.f32.gmra.mxu0 %v855
    %v993 = vpop.f32.mrf.mxu0
    %v994 = vadd.f32 %v445, %v993
    %v995 = vpop.f32.mrf.mxu0
    %996 = vdwg.mxu0
    %997 = vmatprep.subr.mxu0 0.0
    %998 = vmatpush1.msra.mxu0 0.0
    %999 = vmatprep.subr.mxu0 0.0
    %1000 = vmatpush1.msra.mxu0 0.0
    %1001 = vmatprep.subr.mxu0 0.0
    %1002 = vmatpush1.msra.mxu0 0.0
    %1003 = vmatprep.subr.mxu0 0.0
    %1004 = vmatpush1.msra.mxu0 0.0
    %1005 = vmatprep.subr.mxu0 0.0
    %1006 = vmatpush1.msra.mxu0 0.0
    %1007 = vmatprep.subr.mxu0 0.0
    %1008 = vmatpush1.msra.mxu0 0.0
    %1009 = vmatprep.subr.mxu0 0.0
    %1010 = vmatpush1.msra.mxu0 0.0
    %1011 = vmatprep.subr.mxu0 0.0
    %1012 = vmatpush1.msra.mxu0 0.0
    %1013 = vmatprep.subr.mxu0 0.0
    %1014 = vmatpush1.msra.mxu0 0.0
    %1015 = vmatprep.subr.mxu0 0.0
    %1016 = vmatpush1.msra.mxu0 0.0
    %1017 = vmatprep.subr.mxu0 0.0
    %1018 = vmatpush1.msra.mxu0 0.0
    %1019 = vmatprep.subr.mxu0 0.0
    %1020 = vmatpush1.msra.mxu0 0.0
    %1021 = vmatprep.subr.mxu0 0.0
    %1022 = vmatpush1.msra.mxu0 %v354
    %1023 = vmatprep.subr.mxu0 0.0
    %1024 = vmatpush1.msra.mxu0 %v353
    %1025 = vmatprep.subr.mxu0 0.0
    %1026 = vmatpush1.msra.mxu0 %v352
    %1027 = vmatprep.subr.mxu0 0.0
    %1028 = vmatpush1.msra.mxu0 %v351
    %1029 = vmatprep.subr.mxu0 0.0
    %1030 = vmatpush2.msra.mxu0 0.0
    %1031 = vmatprep.subr.mxu0 0.0
    %1032 = vmatpush2.msra.mxu0 0.0
    %1033 = vmatprep.subr.mxu0 0.0
    %1034 = vmatpush2.msra.mxu0 0.0
    %1035 = vmatprep.subr.mxu0 0.0
    %1036 = vmatpush2.msra.mxu0 0.0
    %1037 = vmatprep.subr.mxu0 0.0
    %1038 = vmatpush2.msra.mxu0 0.0
    %1039 = vmatprep.subr.mxu0 0.0
    %1040 = vmatpush2.msra.mxu0 0.0
    %1041 = vmatprep.subr.mxu0 0.0
    %1042 = vmatpush2.msra.mxu0 0.0
    %1043 = vmatprep.subr.mxu0 0.0
    %1044 = vmatpush2.msra.mxu0 0.0
    %1045 = vmatprep.subr.mxu0 0.0
    %1046 = vmatpush2.msra.mxu0 0.0
    %1047 = vmatprep.subr.mxu0 0.0
    %1048 = vmatpush2.msra.mxu0 0.0
    %1049 = vmatprep.subr.mxu0 0.0
    %1050 = vmatpush2.msra.mxu0 0.0
    %1051 = vmatprep.subr.mxu0 0.0
    %1052 = vmatpush2.msra.mxu0 0.0
    %1053 = vmatprep.subr.mxu0 0.0
    %1054 = vmatpush2.msra.mxu0 0.0
    %1055 = vmatprep.subr.mxu0 0.0
    %1056 = vmatpush2.msra.mxu0 0.0
    %1057 = vmatprep.subr.mxu0 0.0
    %1058 = vmatpush2.msra.mxu0 0.0
    %1059 = vmatprep.subr.mxu0 0.0
    %1060 = vmatpush2.msra.mxu0 0.0
    %1061 = vmatprep.mubr.f32.mxu0 0.0
    %1062 = vmatmul.mubr.f32.gmra.mxu0 %v855
    %v1063 = vpop.f32.mrf.mxu0
    %v1064 = vadd.f32 %v521, %v1063
    %v1065 = vpop.f32.mrf.mxu0
    %1066 = vdwg.mxu0
    %v1067 = vadd.f32 %v851, %v924
    %v1068 = vxor.u32 %v1067, 2147483648
    %v1069 = vmul.f32 %v1068, 1.442695
    %v1070 = vpow.pop %v1069
    %v1071 = vadd.f32 %v1070, 1.0
    %v1072 = vrcp.pop %v1071
    %v1073 = vmul.f32 1.0, %v1072
    %v1074 = vadd.f32 %v852, %v994
    %v1075 = vxor.u32 %v1074, 2147483648
    %v1076 = vmul.f32 %v1075, 1.442695
    %v1077 = vpow.pop %v1076
    %v1078 = vadd.f32 %v1077, 1.0
    %v1079 = vrcp.pop %v1078
    %v1080 = vmul.f32 1.0, %v1079
    %v1081 = vmul.f32 %v1073, %v1064
    %v1082 = vadd.f32 %v853, %v1081
    %v1083 = vtanh.pop %v1082
    %v1084 = vsub.f32 1.0, %v1080
    %v1085 = vmul.f32 %v1084, %v1083
    %v1086 = vmul.f32 %v1080, %v850
    %v1087 = vadd.f32 %v1085, %v1086
    %v1088 = vld [vmem:[#allocation2 + $0x6] sm:$0x3]
    %v1089 = vld [vmem:[#allocation3 + $0x6] sm:$0x3]
    %v1090 = vld [vmem:[#allocation4 + $0x6] sm:$0x3]
    %v1092 = vsel %vm241, %v1087, 0
    %1094 = vmatprep.subr.mxu0 0.0
    %1095 = vmatpush1.msra.mxu0 0.0
    %1096 = vmatprep.subr.mxu0 0.0
    %1097 = vmatpush1.msra.mxu0 0.0
    %1098 = vmatprep.subr.mxu0 0.0
    %1099 = vmatpush1.msra.mxu0 0.0
    %1100 = vmatprep.subr.mxu0 0.0
    %1101 = vmatpush1.msra.mxu0 0.0
    %1102 = vmatprep.subr.mxu0 0.0
    %1103 = vmatpush1.msra.mxu0 0.0
    %1104 = vmatprep.subr.mxu0 0.0
    %1105 = vmatpush1.msra.mxu0 0.0
    %1106 = vmatprep.subr.mxu0 0.0
    %1107 = vmatpush1.msra.mxu0 0.0
    %1108 = vmatprep.subr.mxu0 0.0
    %1109 = vmatpush1.msra.mxu0 0.0
    %1110 = vmatprep.subr.mxu0 0.0
    %1111 = vmatpush1.msra.mxu0 0.0
    %1112 = vmatprep.subr.mxu0 0.0
    %1113 = vmatpush1.msra.mxu0 0.0
    %1114 = vmatprep.subr.mxu0 0.0
    %1115 = vmatpush1.msra.mxu0 0.0
    %1116 = vmatprep.subr.mxu0 0.0
    %1117 = vmatpush1.msra.mxu0 0.0
    %1118 = vmatprep.subr.mxu0 0.0
    %1119 = vmatpush1.msra.mxu0 %v346
    %1120 = vmatprep.subr.mxu0 0.0
    %1121 = vmatpush1.msra.mxu0 %v345
    %1122 = vmatprep.subr.mxu0 0.0
    %1123 = vmatpush1.msra.mxu0 %v344
    %1124 = vmatprep.subr.mxu0 0.0
    %1125 = vmatpush1.msra.mxu0 %v343
    %1126 = vmatprep.subr.mxu0 0.0
    %1127 = vmatpush2.msra.mxu0 0.0
    %1128 = vmatprep.subr.mxu0 0.0
    %1129 = vmatpush2.msra.mxu0 0.0
    %1130 = vmatprep.subr.mxu0 0.0
    %1131 = vmatpush2.msra.mxu0 0.0
    %1132 = vmatprep.subr.mxu0 0.0
    %1133 = vmatpush2.msra.mxu0 0.0
    %1134 = vmatprep.subr.mxu0 0.0
    %1135 = vmatpush2.msra.mxu0 0.0
    %1136 = vmatprep.subr.mxu0 0.0
    %1137 = vmatpush2.msra.mxu0 0.0
    %1138 = vmatprep.subr.mxu0 0.0
    %1139 = vmatpush2.msra.mxu0 0.0
    %1140 = vmatprep.subr.mxu0 0.0
    %1141 = vmatpush2.msra.mxu0 0.0
    %1142 = vmatprep.subr.mxu0 0.0
    %1143 = vmatpush2.msra.mxu0 0.0
    %1144 = vmatprep.subr.mxu0 0.0
    %1145 = vmatpush2.msra.mxu0 0.0
    %1146 = vmatprep.subr.mxu0 0.0
    %1147 = vmatpush2.msra.mxu0 0.0
    %1148 = vmatprep.subr.mxu0 0.0
    %1149 = vmatpush2.msra.mxu0 0.0
    %1150 = vmatprep.subr.mxu0 0.0
    %1151 = vmatpush2.msra.mxu0 0.0
    %1152 = vmatprep.subr.mxu0 0.0
    %1153 = vmatpush2.msra.mxu0 0.0
    %1154 = vmatprep.subr.mxu0 0.0
    %1155 = vmatpush2.msra.mxu0 0.0
    %1156 = vmatprep.subr.mxu0 0.0
    %1157 = vmatpush2.msra.mxu0 0.0
    %1158 = vmatprep.mubr.f32.mxu0 0.0
    %1159 = vmatmul.mubr.f32.gmra.mxu0 %v1092
    %v1160 = vpop.f32.mrf.mxu0
    %v1161 = vadd.f32 %v366, %v1160
    %v1162 = vpop.f32.mrf.mxu0
    %1163 = vdwg.mxu0
    %1164 = vmatprep.subr.mxu0 0.0
    %1165 = vmatpush1.msra.mxu0 0.0
    %1166 = vmatprep.subr.mxu0 0.0
    %1167 = vmatpush1.msra.mxu0 0.0
    %1168 = vmatprep.subr.mxu0 0.0
    %1169 = vmatpush1.msra.mxu0 0.0
    %1170 = vmatprep.subr.mxu0 0.0
    %1171 = vmatpush1.msra.mxu0 0.0
    %1172 = vmatprep.subr.mxu0 0.0
    %1173 = vmatpush1.msra.mxu0 0.0
    %1174 = vmatprep.subr.mxu0 0.0
    %1175 = vmatpush1.msra.mxu0 0.0
    %1176 = vmatprep.subr.mxu0 0.0
    %1177 = vmatpush1.msra.mxu0 0.0
    %1178 = vmatprep.subr.mxu0 0.0
    %1179 = vmatpush1.msra.mxu0 0.0
    %1180 = vmatprep.subr.mxu0 0.0
    %1181 = vmatpush1.msra.mxu0 0.0
    %1182 = vmatprep.subr.mxu0 0.0
    %1183 = vmatpush1.msra.mxu0 0.0
    %1184 = vmatprep.subr.mxu0 0.0
    %1185 = vmatpush1.msra.mxu0 0.0
    %1186 = vmatprep.subr.mxu0 0.0
    %1187 = vmatpush1.msra.mxu0 0.0
    %1188 = vmatprep.subr.mxu0 0.0
    %1189 = vmatpush1.msra.mxu0 %v350
    %1190 = vmatprep.subr.mxu0 0.0
    %1191 = vmatpush1.msra.mxu0 %v349
    %1192 = vmatprep.subr.mxu0 0.0
    %1193 = vmatpush1.msra.mxu0 %v348
    %1194 = vmatprep.subr.mxu0 0.0
    %1195 = vmatpush1.msra.mxu0 %v347
    %1196 = vmatprep.subr.mxu0 0.0
    %1197 = vmatpush2.msra.mxu0 0.0
    %1198 = vmatprep.subr.mxu0 0.0
    %1199 = vmatpush2.msra.mxu0 0.0
    %1200 = vmatprep.subr.mxu0 0.0
    %1201 = vmatpush2.msra.mxu0 0.0
    %1202 = vmatprep.subr.mxu0 0.0
    %1203 = vmatpush2.msra.mxu0 0.0
    %1204 = vmatprep.subr.mxu0 0.0
    %1205 = vmatpush2.msra.mxu0 0.0
    %1206 = vmatprep.subr.mxu0 0.0
    %1207 = vmatpush2.msra.mxu0 0.0
    %1208 = vmatprep.subr.mxu0 0.0
    %1209 = vmatpush2.msra.mxu0 0.0
    %1210 = vmatprep.subr.mxu0 0.0
    %1211 = vmatpush2.msra.mxu0 0.0
    %1212 = vmatprep.subr.mxu0 0.0
    %1213 = vmatpush2.msra.mxu0 0.0
    %1214 = vmatprep.subr.mxu0 0.0
    %1215 = vmatpush2.msra.mxu0 0.0
    %1216 = vmatprep.subr.mxu0 0.0
    %1217 = vmatpush2.msra.mxu0 0.0
    %1218 = vmatprep.subr.mxu0 0.0
    %1219 = vmatpush2.msra.mxu0 0.0
    %1220 = vmatprep.subr.mxu0 0.0
    %1221 = vmatpush2.msra.mxu0 0.0
    %1222 = vmatprep.subr.mxu0 0.0
    %1223 = vmatpush2.msra.mxu0 0.0
    %1224 = vmatprep.subr.mxu0 0.0
    %1225 = vmatpush2.msra.mxu0 0.0
    %1226 = vmatprep.subr.mxu0 0.0
    %1227 = vmatpush2.msra.mxu0 0.0
    %1228 = vmatprep.mubr.f32.mxu0 0.0
    %1229 = vmatmul.mubr.f32.gmra.mxu0 %v1092
    %v1230 = vpop.f32.mrf.mxu0
    %v1231 = vadd.f32 %v445, %v1230
    %v1232 = vpop.f32.mrf.mxu0
    %1233 = vdwg.mxu0
    %1234 = vmatprep.subr.mxu0 0.0
    %1235 = vmatpush1.msra.mxu0 0.0
    %1236 = vmatprep.subr.mxu0 0.0
    %1237 = vmatpush1.msra.mxu0 0.0
    %1238 = vmatprep.subr.mxu0 0.0
    %1239 = vmatpush1.msra.mxu0 0.0
    %1240 = vmatprep.subr.mxu0 0.0
    %1241 = vmatpush1.msra.mxu0 0.0
    %1242 = vmatprep.subr.mxu0 0.0
    %1243 = vmatpush1.msra.mxu0 0.0
    %1244 = vmatprep.subr.mxu0 0.0
    %1245 = vmatpush1.msra.mxu0 0.0
    %1246 = vmatprep.subr.mxu0 0.0
    %1247 = vmatpush1.msra.mxu0 0.0
    %1248 = vmatprep.subr.mxu0 0.0
    %1249 = vmatpush1.msra.mxu0 0.0
    %1250 = vmatprep.subr.mxu0 0.0
    %1251 = vmatpush1.msra.mxu0 0.0
    %1252 = vmatprep.subr.mxu0 0.0
    %1253 = vmatpush1.msra.mxu0 0.0
    %1254 = vmatprep.subr.mxu0 0.0
    %1255 = vmatpush1.msra.mxu0 0.0
    %1256 = vmatprep.subr.mxu0 0.0
    %1257 = vmatpush1.msra.mxu0 0.0
    %1258 = vmatprep.subr.mxu0 0.0
    %1259 = vmatpush1.msra.mxu0 %v354
    %1260 = vmatprep.subr.mxu0 0.0
    %1261 = vmatpush1.msra.mxu0 %v353
    %1262 = vmatprep.subr.mxu0 0.0
    %1263 = vmatpush1.msra.mxu0 %v352
    %1264 = vmatprep.subr.mxu0 0.0
    %1265 = vmatpush1.msra.mxu0 %v351
    %1266 = vmatprep.subr.mxu0 0.0
    %1267 = vmatpush2.msra.mxu0 0.0
    %1268 = vmatprep.subr.mxu0 0.0
    %1269 = vmatpush2.msra.mxu0 0.0
    %1270 = vmatprep.subr.mxu0 0.0
    %1271 = vmatpush2.msra.mxu0 0.0
    %1272 = vmatprep.subr.mxu0 0.0
    %1273 = vmatpush2.msra.mxu0 0.0
    %1274 = vmatprep.subr.mxu0 0.0
    %1275 = vmatpush2.msra.mxu0 0.0
    %1276 = vmatprep.subr.mxu0 0.0
    %1277 = vmatpush2.msra.mxu0 0.0
    %1278 = vmatprep.subr.mxu0 0.0
    %1279 = vmatpush2.msra.mxu0 0.0
    %1280 = vmatprep.subr.mxu0 0.0
    %1281 = vmatpush2.msra.mxu0 0.0
    %1282 = vmatprep.subr.mxu0 0.0
    %1283 = vmatpush2.msra.mxu0 0.0
    %1284 = vmatprep.subr.mxu0 0.0
    %1285 = vmatpush2.msra.mxu0 0.0
    %1286 = vmatprep.subr.mxu0 0.0
    %1287 = vmatpush2.msra.mxu0 0.0
    %1288 = vmatprep.subr.mxu0 0.0
    %1289 = vmatpush2.msra.mxu0 0.0
    %1290 = vmatprep.subr.mxu0 0.0
    %1291 = vmatpush2.msra.mxu0 0.0
    %1292 = vmatprep.subr.mxu0 0.0
    %1293 = vmatpush2.msra.mxu0 0.0
    %1294 = vmatprep.subr.mxu0 0.0
    %1295 = vmatpush2.msra.mxu0 0.0
    %1296 = vmatprep.subr.mxu0 0.0
    %1297 = vmatpush2.msra.mxu0 0.0
    %1298 = vmatprep.mubr.f32.mxu0 0.0
    %1299 = vmatmul.mubr.f32.gmra.mxu0 %v1092
    %v1300 = vpop.f32.mrf.mxu0
    %v1301 = vadd.f32 %v521, %v1300
    %v1302 = vpop.f32.mrf.mxu0
    %1303 = vdwg.mxu0
    %v1304 = vadd.f32 %v1088, %v1161
    %v1305 = vxor.u32 %v1304, 2147483648
    %v1306 = vmul.f32 %v1305, 1.442695
    %v1307 = vpow.pop %v1306
    %v1308 = vadd.f32 %v1307, 1.0
    %v1309 = vrcp.pop %v1308
    %v1310 = vmul.f32 1.0, %v1309
    %v1311 = vadd.f32 %v1089, %v1231
    %v1312 = vxor.u32 %v1311, 2147483648
    %v1313 = vmul.f32 %v1312, 1.442695
    %v1314 = vpow.pop %v1313
    %v1315 = vadd.f32 %v1314, 1.0
    %v1316 = vrcp.pop %v1315
    %v1317 = vmul.f32 1.0, %v1316
    %v1318 = vmul.f32 %v1310, %v1301
    %v1319 = vadd.f32 %v1090, %v1318
    %v1320 = vtanh.pop %v1319
    %v1321 = vsub.f32 1.0, %v1317
    %v1322 = vmul.f32 %v1321, %v1320
    %v1323 = vmul.f32 %v1317, %v1087
    %v1324 = vadd.f32 %v1322, %v1323
    %v1325 = vld [vmem:[#allocation2 + $0x8] sm:$0x3]
    %v1326 = vld [vmem:[#allocation3 + $0x8] sm:$0x3]
    %v1327 = vld [vmem:[#allocation4 + $0x8] sm:$0x3]
    %v1329 = vsel %vm241, %v1324, 0
    %1331 = vmatprep.subr.mxu0 0.0
    %1332 = vmatpush1.msra.mxu0 0.0
    %1333 = vmatprep.subr.mxu0 0.0
    %1334 = vmatpush1.msra.mxu0 0.0
    %1335 = vmatprep.subr.mxu0 0.0
    %1336 = vmatpush1.msra.mxu0 0.0
    %1337 = vmatprep.subr.mxu0 0.0
    %1338 = vmatpush1.msra.mxu0 0.0
    %1339 = vmatprep.subr.mxu0 0.0
    %1340 = vmatpush1.msra.mxu0 0.0
    %1341 = vmatprep.subr.mxu0 0.0
    %1342 = vmatpush1.msra.mxu0 0.0
    %1343 = vmatprep.subr.mxu0 0.0
    %1344 = vmatpush1.msra.mxu0 0.0
    %1345 = vmatprep.subr.mxu0 0.0
    %1346 = vmatpush1.msra.mxu0 0.0
    %1347 = vmatprep.subr.mxu0 0.0
    %1348 = vmatpush1.msra.mxu0 0.0
    %1349 = vmatprep.subr.mxu0 0.0
    %1350 = vmatpush1.msra.mxu0 0.0
    %1351 = vmatprep.subr.mxu0 0.0
    %1352 = vmatpush1.msra.mxu0 0.0
    %1353 = vmatprep.subr.mxu0 0.0
    %1354 = vmatpush1.msra.mxu0 0.0
    %1355 = vmatprep.subr.mxu0 0.0
    %1356 = vmatpush1.msra.mxu0 %v346
    %1357 = vmatprep.subr.mxu0 0.0
    %1358 = vmatpush1.msra.mxu0 %v345
    %1359 = vmatprep.subr.mxu0 0.0
    %1360 = vmatpush1.msra.mxu0 %v344
    %1361 = vmatprep.subr.mxu0 0.0
    %1362 = vmatpush1.msra.mxu0 %v343
    %1363 = vmatprep.subr.mxu0 0.0
    %1364 = vmatpush2.msra.mxu0 0.0
    %1365 = vmatprep.subr.mxu0 0.0
    %1366 = vmatpush2.msra.mxu0 0.0
    %1367 = vmatprep.subr.mxu0 0.0
    %1368 = vmatpush2.msra.mxu0 0.0
    %1369 = vmatprep.subr.mxu0 0.0
    %1370 = vmatpush2.msra.mxu0 0.0
    %1371 = vmatprep.subr.mxu0 0.0
    %1372 = vmatpush2.msra.mxu0 0.0
    %1373 = vmatprep.subr.mxu0 0.0
    %1374 = vmatpush2.msra.mxu0 0.0
    %1375 = vmatprep.subr.mxu0 0.0
    %1376 = vmatpush2.msra.mxu0 0.0
    %1377 = vmatprep.subr.mxu0 0.0
    %1378 = vmatpush2.msra.mxu0 0.0
    %1379 = vmatprep.subr.mxu0 0.0
    %1380 = vmatpush2.msra.mxu0 0.0
    %1381 = vmatprep.subr.mxu0 0.0
    %1382 = vmatpush2.msra.mxu0 0.0
    %1383 = vmatprep.subr.mxu0 0.0
    %1384 = vmatpush2.msra.mxu0 0.0
    %1385 = vmatprep.subr.mxu0 0.0
    %1386 = vmatpush2.msra.mxu0 0.0
    %1387 = vmatprep.subr.mxu0 0.0
    %1388 = vmatpush2.msra.mxu0 0.0
    %1389 = vmatprep.subr.mxu0 0.0
    %1390 = vmatpush2.msra.mxu0 0.0
    %1391 = vmatprep.subr.mxu0 0.0
    %1392 = vmatpush2.msra.mxu0 0.0
    %1393 = vmatprep.subr.mxu0 0.0
    %1394 = vmatpush2.msra.mxu0 0.0
    %1395 = vmatprep.mubr.f32.mxu0 0.0
    %1396 = vmatmul.mubr.f32.gmra.mxu0 %v1329
    %v1397 = vpop.f32.mrf.mxu0
    %v1398 = vadd.f32 %v366, %v1397
    %v1399 = vpop.f32.mrf.mxu0
    %1400 = vdwg.mxu0
    %1401 = vmatprep.subr.mxu0 0.0
    %1402 = vmatpush1.msra.mxu0 0.0
    %1403 = vmatprep.subr.mxu0 0.0
    %1404 = vmatpush1.msra.mxu0 0.0
    %1405 = vmatprep.subr.mxu0 0.0
    %1406 = vmatpush1.msra.mxu0 0.0
    %1407 = vmatprep.subr.mxu0 0.0
    %1408 = vmatpush1.msra.mxu0 0.0
    %1409 = vmatprep.subr.mxu0 0.0
    %1410 = vmatpush1.msra.mxu0 0.0
    %1411 = vmatprep.subr.mxu0 0.0
    %1412 = vmatpush1.msra.mxu0 0.0
    %1413 = vmatprep.subr.mxu0 0.0
    %1414 = vmatpush1.msra.mxu0 0.0
    %1415 = vmatprep.subr.mxu0 0.0
    %1416 = vmatpush1.msra.mxu0 0.0
    %1417 = vmatprep.subr.mxu0 0.0
    %1418 = vmatpush1.msra.mxu0 0.0
    %1419 = vmatprep.subr.mxu0 0.0
    %1420 = vmatpush1.msra.mxu0 0.0
    %1421 = vmatprep.subr.mxu0 0.0
    %1422 = vmatpush1.msra.mxu0 0.0
    %1423 = vmatprep.subr.mxu0 0.0
    %1424 = vmatpush1.msra.mxu0 0.0
    %1425 = vmatprep.subr.mxu0 0.0
    %1426 = vmatpush1.msra.mxu0 %v350
    %1427 = vmatprep.subr.mxu0 0.0
    %1428 = vmatpush1.msra.mxu0 %v349
    %1429 = vmatprep.subr.mxu0 0.0
    %1430 = vmatpush1.msra.mxu0 %v348
    %1431 = vmatprep.subr.mxu0 0.0
    %1432 = vmatpush1.msra.mxu0 %v347
    %1433 = vmatprep.subr.mxu0 0.0
    %1434 = vmatpush2.msra.mxu0 0.0
    %1435 = vmatprep.subr.mxu0 0.0
    %1436 = vmatpush2.msra.mxu0 0.0
    %1437 = vmatprep.subr.mxu0 0.0
    %1438 = vmatpush2.msra.mxu0 0.0
    %1439 = vmatprep.subr.mxu0 0.0
    %1440 = vmatpush2.msra.mxu0 0.0
    %1441 = vmatprep.subr.mxu0 0.0
    %1442 = vmatpush2.msra.mxu0 0.0
    %1443 = vmatprep.subr.mxu0 0.0
    %1444 = vmatpush2.msra.mxu0 0.0
    %1445 = vmatprep.subr.mxu0 0.0
    %1446 = vmatpush2.msra.mxu0 0.0
    %1447 = vmatprep.subr.mxu0 0.0
    %1448 = vmatpush2.msra.mxu0 0.0
    %1449 = vmatprep.subr.mxu0 0.0
    %1450 = vmatpush2.msra.mxu0 0.0
    %1451 = vmatprep.subr.mxu0 0.0
    %1452 = vmatpush2.msra.mxu0 0.0
    %1453 = vmatprep.subr.mxu0 0.0
    %1454 = vmatpush2.msra.mxu0 0.0
    %1455 = vmatprep.subr.mxu0 0.0
    %1456 = vmatpush2.msra.mxu0 0.0
    %1457 = vmatprep.subr.mxu0 0.0
    %1458 = vmatpush2.msra.mxu0 0.0
    %1459 = vmatprep.subr.mxu0 0.0
    %1460 = vmatpush2.msra.mxu0 0.0
    %1461 = vmatprep.subr.mxu0 0.0
    %1462 = vmatpush2.msra.mxu0 0.0
    %1463 = vmatprep.subr.mxu0 0.0
    %1464 = vmatpush2.msra.mxu0 0.0
    %1465 = vmatprep.mubr.f32.mxu0 0.0
    %1466 = vmatmul.mubr.f32.gmra.mxu0 %v1329
    %v1467 = vpop.f32.mrf.mxu0
    %v1468 = vadd.f32 %v445, %v1467
    %v1469 = vpop.f32.mrf.mxu0
    %1470 = vdwg.mxu0
    %1471 = vmatprep.subr.mxu0 0.0
    %1472 = vmatpush1.msra.mxu0 0.0
    %1473 = vmatprep.subr.mxu0 0.0
    %1474 = vmatpush1.msra.mxu0 0.0
    %1475 = vmatprep.subr.mxu0 0.0
    %1476 = vmatpush1.msra.mxu0 0.0
    %1477 = vmatprep.subr.mxu0 0.0
    %1478 = vmatpush1.msra.mxu0 0.0
    %1479 = vmatprep.subr.mxu0 0.0
    %1480 = vmatpush1.msra.mxu0 0.0
    %1481 = vmatprep.subr.mxu0 0.0
    %1482 = vmatpush1.msra.mxu0 0.0
    %1483 = vmatprep.subr.mxu0 0.0
    %1484 = vmatpush1.msra.mxu0 0.0
    %1485 = vmatprep.subr.mxu0 0.0
    %1486 = vmatpush1.msra.mxu0 0.0
    %1487 = vmatprep.subr.mxu0 0.0
    %1488 = vmatpush1.msra.mxu0 0.0
    %1489 = vmatprep.subr.mxu0 0.0
    %1490 = vmatpush1.msra.mxu0 0.0
    %1491 = vmatprep.subr.mxu0 0.0
    %1492 = vmatpush1.msra.mxu0 0.0
    %1493 = vmatprep.subr.mxu0 0.0
    %1494 = vmatpush1.msra.mxu0 0.0
    %1495 = vmatprep.subr.mxu0 0.0
    %1496 = vmatpush1.msra.mxu0 %v354
    %1497 = vmatprep.subr.mxu0 0.0
    %1498 = vmatpush1.msra.mxu0 %v353
    %1499 = vmatprep.subr.mxu0 0.0
    %1500 = vmatpush1.msra.mxu0 %v352
    %1501 = vmatprep.subr.mxu0 0.0
    %1502 = vmatpush1.msra.mxu0 %v351
    %1503 = vmatprep.subr.mxu0 0.0
    %1504 = vmatpush2.msra.mxu0 0.0
    %1505 = vmatprep.subr.mxu0 0.0
    %1506 = vmatpush2.msra.mxu0 0.0
    %1507 = vmatprep.subr.mxu0 0.0
    %1508 = vmatpush2.msra.mxu0 0.0
    %1509 = vmatprep.subr.mxu0 0.0
    %1510 = vmatpush2.msra.mxu0 0.0
    %1511 = vmatprep.subr.mxu0 0.0
    %1512 = vmatpush2.msra.mxu0 0.0
    %1513 = vmatprep.subr.mxu0 0.0
    %1514 = vmatpush2.msra.mxu0 0.0
    %1515 = vmatprep.subr.mxu0 0.0
    %1516 = vmatpush2.msra.mxu0 0.0
    %1517 = vmatprep.subr.mxu0 0.0
    %1518 = vmatpush2.msra.mxu0 0.0
    %1519 = vmatprep.subr.mxu0 0.0
    %1520 = vmatpush2.msra.mxu0 0.0
    %1521 = vmatprep.subr.mxu0 0.0
    %1522 = vmatpush2.msra.mxu0 0.0
    %1523 = vmatprep.subr.mxu0 0.0
    %1524 = vmatpush2.msra.mxu0 0.0
    %1525 = vmatprep.subr.mxu0 0.0
    %1526 = vmatpush2.msra.mxu0 0.0
    %1527 = vmatprep.subr.mxu0 0.0
    %1528 = vmatpush2.msra.mxu0 0.0
    %1529 = vmatprep.subr.mxu0 0.0
    %1530 = vmatpush2.msra.mxu0 0.0
    %1531 = vmatprep.subr.mxu0 0.0
    %1532 = vmatpush2.msra.mxu0 0.0
    %1533 = vmatprep.subr.mxu0 0.0
    %1534 = vmatpush2.msra.mxu0 0.0
    %1535 = vmatprep.mubr.f32.mxu0 0.0
    %1536 = vmatmul.mubr.f32.gmra.mxu0 %v1329
    %v1537 = vpop.f32.mrf.mxu0
    %v1538 = vadd.f32 %v521, %v1537
    %v1539 = vpop.f32.mrf.mxu0
    %1540 = vdwg.mxu0
    %v1541 = vadd.f32 %v1325, %v1398
    %v1542 = vxor.u32 %v1541, 2147483648
    %v1543 = vmul.f32 %v1542, 1.442695
    %v1544 = vpow.pop %v1543
    %v1545 = vadd.f32 %v1544, 1.0
    %v1546 = vrcp.pop %v1545
    %v1547 = vmul.f32 1.0, %v1546
    %v1548 = vadd.f32 %v1326, %v1468
    %v1549 = vxor.u32 %v1548, 2147483648
    %v1550 = vmul.f32 %v1549, 1.442695
    %v1551 = vpow.pop %v1550
    %v1552 = vadd.f32 %v1551, 1.0
    %v1553 = vrcp.pop %v1552
    %v1554 = vmul.f32 1.0, %v1553
    %v1555 = vmul.f32 %v1547, %v1538
    %v1556 = vadd.f32 %v1327, %v1555
    %v1557 = vtanh.pop %v1556
    %v1558 = vsub.f32 1.0, %v1554
    %v1559 = vmul.f32 %v1558, %v1557
    %v1560 = vmul.f32 %v1554, %v1324
    %v1561 = vadd.f32 %v1559, %v1560
    %v1562 = vld [vmem:[#allocation2 + $0xa] sm:$0x3]
    %v1563 = vld [vmem:[#allocation3 + $0xa] sm:$0x3]
    %v1564 = vld [vmem:[#allocation4 + $0xa] sm:$0x3]
    %v1566 = vsel %vm241, %v1561, 0
    %1568 = vmatprep.subr.mxu0 0.0
    %1569 = vmatpush1.msra.mxu0 0.0
    %1570 = vmatprep.subr.mxu0 0.0
    %1571 = vmatpush1.msra.mxu0 0.0
    %1572 = vmatprep.subr.mxu0 0.0
    %1573 = vmatpush1.msra.mxu0 0.0
    %1574 = vmatprep.subr.mxu0 0.0
    %1575 = vmatpush1.msra.mxu0 0.0
    %1576 = vmatprep.subr.mxu0 0.0
    %1577 = vmatpush1.msra.mxu0 0.0
    %1578 = vmatprep.subr.mxu0 0.0
    %1579 = vmatpush1.msra.mxu0 0.0
    %1580 = vmatprep.subr.mxu0 0.0
    %1581 = vmatpush1.msra.mxu0 0.0
    %1582 = vmatprep.subr.mxu0 0.0
    %1583 = vmatpush1.msra.mxu0 0.0
    %1584 = vmatprep.subr.mxu0 0.0
    %1585 = vmatpush1.msra.mxu0 0.0
    %1586 = vmatprep.subr.mxu0 0.0
    %1587 = vmatpush1.msra.mxu0 0.0
    %1588 = vmatprep.subr.mxu0 0.0
    %1589 = vmatpush1.msra.mxu0 0.0
    %1590 = vmatprep.subr.mxu0 0.0
    %1591 = vmatpush1.msra.mxu0 0.0
    %1592 = vmatprep.subr.mxu0 0.0
    %1593 = vmatpush1.msra.mxu0 %v346
    %1594 = vmatprep.subr.mxu0 0.0
    %1595 = vmatpush1.msra.mxu0 %v345
    %1596 = vmatprep.subr.mxu0 0.0
    %1597 = vmatpush1.msra.mxu0 %v344
    %1598 = vmatprep.subr.mxu0 0.0
    %1599 = vmatpush1.msra.mxu0 %v343
    %1600 = vmatprep.subr.mxu0 0.0
    %1601 = vmatpush2.msra.mxu0 0.0
    %1602 = vmatprep.subr.mxu0 0.0
    %1603 = vmatpush2.msra.mxu0 0.0
    %1604 = vmatprep.subr.mxu0 0.0
    %1605 = vmatpush2.msra.mxu0 0.0
    %1606 = vmatprep.subr.mxu0 0.0
    %1607 = vmatpush2.msra.mxu0 0.0
    %1608 = vmatprep.subr.mxu0 0.0
    %1609 = vmatpush2.msra.mxu0 0.0
    %1610 = vmatprep.subr.mxu0 0.0
    %1611 = vmatpush2.msra.mxu0 0.0
    %1612 = vmatprep.subr.mxu0 0.0
    %1613 = vmatpush2.msra.mxu0 0.0
    %1614 = vmatprep.subr.mxu0 0.0
    %1615 = vmatpush2.msra.mxu0 0.0
    %1616 = vmatprep.subr.mxu0 0.0
    %1617 = vmatpush2.msra.mxu0 0.0
    %1618 = vmatprep.subr.mxu0 0.0
    %1619 = vmatpush2.msra.mxu0 0.0
    %1620 = vmatprep.subr.mxu0 0.0
    %1621 = vmatpush2.msra.mxu0 0.0
    %1622 = vmatprep.subr.mxu0 0.0
    %1623 = vmatpush2.msra.mxu0 0.0
    %1624 = vmatprep.subr.mxu0 0.0
    %1625 = vmatpush2.msra.mxu0 0.0
    %1626 = vmatprep.subr.mxu0 0.0
    %1627 = vmatpush2.msra.mxu0 0.0
    %1628 = vmatprep.subr.mxu0 0.0
    %1629 = vmatpush2.msra.mxu0 0.0
    %1630 = vmatprep.subr.mxu0 0.0
    %1631 = vmatpush2.msra.mxu0 0.0
    %1632 = vmatprep.mubr.f32.mxu0 0.0
    %1633 = vmatmul.mubr.f32.gmra.mxu0 %v1566
    %v1634 = vpop.f32.mrf.mxu0
    %v1635 = vadd.f32 %v366, %v1634
    %v1636 = vpop.f32.mrf.mxu0
    %1637 = vdwg.mxu0
    %1638 = vmatprep.subr.mxu0 0.0
    %1639 = vmatpush1.msra.mxu0 0.0
    %1640 = vmatprep.subr.mxu0 0.0
    %1641 = vmatpush1.msra.mxu0 0.0
    %1642 = vmatprep.subr.mxu0 0.0
    %1643 = vmatpush1.msra.mxu0 0.0
    %1644 = vmatprep.subr.mxu0 0.0
    %1645 = vmatpush1.msra.mxu0 0.0
    %1646 = vmatprep.subr.mxu0 0.0
    %1647 = vmatpush1.msra.mxu0 0.0
    %1648 = vmatprep.subr.mxu0 0.0
    %1649 = vmatpush1.msra.mxu0 0.0
    %1650 = vmatprep.subr.mxu0 0.0
    %1651 = vmatpush1.msra.mxu0 0.0
    %1652 = vmatprep.subr.mxu0 0.0
    %1653 = vmatpush1.msra.mxu0 0.0
    %1654 = vmatprep.subr.mxu0 0.0
    %1655 = vmatpush1.msra.mxu0 0.0
    %1656 = vmatprep.subr.mxu0 0.0
    %1657 = vmatpush1.msra.mxu0 0.0
    %1658 = vmatprep.subr.mxu0 0.0
    %1659 = vmatpush1.msra.mxu0 0.0
    %1660 = vmatprep.subr.mxu0 0.0
    %1661 = vmatpush1.msra.mxu0 0.0
    %1662 = vmatprep.subr.mxu0 0.0
    %1663 = vmatpush1.msra.mxu0 %v350
    %1664 = vmatprep.subr.mxu0 0.0
    %1665 = vmatpush1.msra.mxu0 %v349
    %1666 = vmatprep.subr.mxu0 0.0
    %1667 = vmatpush1.msra.mxu0 %v348
    %1668 = vmatprep.subr.mxu0 0.0
    %1669 = vmatpush1.msra.mxu0 %v347
    %1670 = vmatprep.subr.mxu0 0.0
    %1671 = vmatpush2.msra.mxu0 0.0
    %1672 = vmatprep.subr.mxu0 0.0
    %1673 = vmatpush2.msra.mxu0 0.0
    %1674 = vmatprep.subr.mxu0 0.0
    %1675 = vmatpush2.msra.mxu0 0.0
    %1676 = vmatprep.subr.mxu0 0.0
    %1677 = vmatpush2.msra.mxu0 0.0
    %1678 = vmatprep.subr.mxu0 0.0
    %1679 = vmatpush2.msra.mxu0 0.0
    %1680 = vmatprep.subr.mxu0 0.0
    %1681 = vmatpush2.msra.mxu0 0.0
    %1682 = vmatprep.subr.mxu0 0.0
    %1683 = vmatpush2.msra.mxu0 0.0
    %1684 = vmatprep.subr.mxu0 0.0
    %1685 = vmatpush2.msra.mxu0 0.0
    %1686 = vmatprep.subr.mxu0 0.0
    %1687 = vmatpush2.msra.mxu0 0.0
    %1688 = vmatprep.subr.mxu0 0.0
    %1689 = vmatpush2.msra.mxu0 0.0
    %1690 = vmatprep.subr.mxu0 0.0
    %1691 = vmatpush2.msra.mxu0 0.0
    %1692 = vmatprep.subr.mxu0 0.0
    %1693 = vmatpush2.msra.mxu0 0.0
    %1694 = vmatprep.subr.mxu0 0.0
    %1695 = vmatpush2.msra.mxu0 0.0
    %1696 = vmatprep.subr.mxu0 0.0
    %1697 = vmatpush2.msra.mxu0 0.0
    %1698 = vmatprep.subr.mxu0 0.0
    %1699 = vmatpush2.msra.mxu0 0.0
    %1700 = vmatprep.subr.mxu0 0.0
    %1701 = vmatpush2.msra.mxu0 0.0
    %1702 = vmatprep.mubr.f32.mxu0 0.0
    %1703 = vmatmul.mubr.f32.gmra.mxu0 %v1566
    %v1704 = vpop.f32.mrf.mxu0
    %v1705 = vadd.f32 %v445, %v1704
    %v1706 = vpop.f32.mrf.mxu0
    %1707 = vdwg.mxu0
    %1708 = vmatprep.subr.mxu0 0.0
    %1709 = vmatpush1.msra.mxu0 0.0
    %1710 = vmatprep.subr.mxu0 0.0
    %1711 = vmatpush1.msra.mxu0 0.0
    %1712 = vmatprep.subr.mxu0 0.0
    %1713 = vmatpush1.msra.mxu0 0.0
    %1714 = vmatprep.subr.mxu0 0.0
    %1715 = vmatpush1.msra.mxu0 0.0
    %1716 = vmatprep.subr.mxu0 0.0
    %1717 = vmatpush1.msra.mxu0 0.0
    %1718 = vmatprep.subr.mxu0 0.0
    %1719 = vmatpush1.msra.mxu0 0.0
    %1720 = vmatprep.subr.mxu0 0.0
    %1721 = vmatpush1.msra.mxu0 0.0
    %1722 = vmatprep.subr.mxu0 0.0
    %1723 = vmatpush1.msra.mxu0 0.0
    %1724 = vmatprep.subr.mxu0 0.0
    %1725 = vmatpush1.msra.mxu0 0.0
    %1726 = vmatprep.subr.mxu0 0.0
    %1727 = vmatpush1.msra.mxu0 0.0
    %1728 = vmatprep.subr.mxu0 0.0
    %1729 = vmatpush1.msra.mxu0 0.0
    %1730 = vmatprep.subr.mxu0 0.0
    %1731 = vmatpush1.msra.mxu0 0.0
    %1732 = vmatprep.subr.mxu0 0.0
    %1733 = vmatpush1.msra.mxu0 %v354
    %1734 = vmatprep.subr.mxu0 0.0
    %1735 = vmatpush1.msra.mxu0 %v353
    %1736 = vmatprep.subr.mxu0 0.0
    %1737 = vmatpush1.msra.mxu0 %v352
    %1738 = vmatprep.subr.mxu0 0.0
    %1739 = vmatpush1.msra.mxu0 %v351
    %1740 = vmatprep.subr.mxu0 0.0
    %1741 = vmatpush2.msra.mxu0 0.0
    %1742 = vmatprep.subr.mxu0 0.0
    %1743 = vmatpush2.msra.mxu0 0.0
    %1744 = vmatprep.subr.mxu0 0.0
    %1745 = vmatpush2.msra.mxu0 0.0
    %1746 = vmatprep.subr.mxu0 0.0
    %1747 = vmatpush2.msra.mxu0 0.0
    %1748 = vmatprep.subr.mxu0 0.0
    %1749 = vmatpush2.msra.mxu0 0.0
    %1750 = vmatprep.subr.mxu0 0.0
    %1751 = vmatpush2.msra.mxu0 0.0
    %1752 = vmatprep.subr.mxu0 0.0
    %1753 = vmatpush2.msra.mxu0 0.0
    %1754 = vmatprep.subr.mxu0 0.0
    %1755 = vmatpush2.msra.mxu0 0.0
    %1756 = vmatprep.subr.mxu0 0.0
    %1757 = vmatpush2.msra.mxu0 0.0
    %1758 = vmatprep.subr.mxu0 0.0
    %1759 = vmatpush2.msra.mxu0 0.0
    %1760 = vmatprep.subr.mxu0 0.0
    %1761 = vmatpush2.msra.mxu0 0.0
    %1762 = vmatprep.subr.mxu0 0.0
    %1763 = vmatpush2.msra.mxu0 0.0
    %1764 = vmatprep.subr.mxu0 0.0
    %1765 = vmatpush2.msra.mxu0 0.0
    %1766 = vmatprep.subr.mxu0 0.0
    %1767 = vmatpush2.msra.mxu0 0.0
    %1768 = vmatprep.subr.mxu0 0.0
    %1769 = vmatpush2.msra.mxu0 0.0
    %1770 = vmatprep.subr.mxu0 0.0
    %1771 = vmatpush2.msra.mxu0 0.0
    %1772 = vmatprep.mubr.f32.mxu0 0.0
    %1773 = vmatmul.mubr.f32.gmra.mxu0 %v1566
    %v1774 = vpop.f32.mrf.mxu0
    %v1775 = vadd.f32 %v521, %v1774
    %v1776 = vpop.f32.mrf.mxu0
    %1777 = vdwg.mxu0
    %v1778 = vadd.f32 %v1562, %v1635
    %v1779 = vxor.u32 %v1778, 2147483648
    %v1780 = vmul.f32 %v1779, 1.442695
    %v1781 = vpow.pop %v1780
    %v1782 = vadd.f32 %v1781, 1.0
    %v1783 = vrcp.pop %v1782
    %v1784 = vmul.f32 1.0, %v1783
    %v1785 = vadd.f32 %v1563, %v1705
    %v1786 = vxor.u32 %v1785, 2147483648
    %v1787 = vmul.f32 %v1786, 1.442695
    %v1788 = vpow.pop %v1787
    %v1789 = vadd.f32 %v1788, 1.0
    %v1790 = vrcp.pop %v1789
    %v1791 = vmul.f32 1.0, %v1790
    %v1792 = vmul.f32 %v1784, %v1775
    %v1793 = vadd.f32 %v1564, %v1792
    %v1794 = vtanh.pop %v1793
    %v1795 = vsub.f32 1.0, %v1791
    %v1796 = vmul.f32 %v1795, %v1794
    %v1797 = vmul.f32 %v1791, %v1561
    %v1798 = vadd.f32 %v1796, %v1797
    %v1799 = vld [vmem:[#allocation2 + $0xc] sm:$0x3]
    %v1800 = vld [vmem:[#allocation3 + $0xc] sm:$0x3]
    %v1801 = vld [vmem:[#allocation4 + $0xc] sm:$0x3]
    %v1803 = vsel %vm241, %v1798, 0
    %1805 = vmatprep.subr.mxu0 0.0
    %1806 = vmatpush1.msra.mxu0 0.0
    %1807 = vmatprep.subr.mxu0 0.0
    %1808 = vmatpush1.msra.mxu0 0.0
    %1809 = vmatprep.subr.mxu0 0.0
    %1810 = vmatpush1.msra.mxu0 0.0
    %1811 = vmatprep.subr.mxu0 0.0
    %1812 = vmatpush1.msra.mxu0 0.0
    %1813 = vmatprep.subr.mxu0 0.0
    %1814 = vmatpush1.msra.mxu0 0.0
    %1815 = vmatprep.subr.mxu0 0.0
    %1816 = vmatpush1.msra.mxu0 0.0
    %1817 = vmatprep.subr.mxu0 0.0
    %1818 = vmatpush1.msra.mxu0 0.0
    %1819 = vmatprep.subr.mxu0 0.0
    %1820 = vmatpush1.msra.mxu0 0.0
    %1821 = vmatprep.subr.mxu0 0.0
    %1822 = vmatpush1.msra.mxu0 0.0
    %1823 = vmatprep.subr.mxu0 0.0
    %1824 = vmatpush1.msra.mxu0 0.0
    %1825 = vmatprep.subr.mxu0 0.0
    %1826 = vmatpush1.msra.mxu0 0.0
    %1827 = vmatprep.subr.mxu0 0.0
    %1828 = vmatpush1.msra.mxu0 0.0
    %1829 = vmatprep.subr.mxu0 0.0
    %1830 = vmatpush1.msra.mxu0 %v346
    %1831 = vmatprep.subr.mxu0 0.0
    %1832 = vmatpush1.msra.mxu0 %v345
    %1833 = vmatprep.subr.mxu0 0.0
    %1834 = vmatpush1.msra.mxu0 %v344
    %1835 = vmatprep.subr.mxu0 0.0
    %1836 = vmatpush1.msra.mxu0 %v343
    %1837 = vmatprep.subr.mxu0 0.0
    %1838 = vmatpush2.msra.mxu0 0.0
    %1839 = vmatprep.subr.mxu0 0.0
    %1840 = vmatpush2.msra.mxu0 0.0
    %1841 = vmatprep.subr.mxu0 0.0
    %1842 = vmatpush2.msra.mxu0 0.0
    %1843 = vmatprep.subr.mxu0 0.0
    %1844 = vmatpush2.msra.mxu0 0.0
    %1845 = vmatprep.subr.mxu0 0.0
    %1846 = vmatpush2.msra.mxu0 0.0
    %1847 = vmatprep.subr.mxu0 0.0
    %1848 = vmatpush2.msra.mxu0 0.0
    %1849 = vmatprep.subr.mxu0 0.0
    %1850 = vmatpush2.msra.mxu0 0.0
    %1851 = vmatprep.subr.mxu0 0.0
    %1852 = vmatpush2.msra.mxu0 0.0
    %1853 = vmatprep.subr.mxu0 0.0
    %1854 = vmatpush2.msra.mxu0 0.0
    %1855 = vmatprep.subr.mxu0 0.0
    %1856 = vmatpush2.msra.mxu0 0.0
    %1857 = vmatprep.subr.mxu0 0.0
    %1858 = vmatpush2.msra.mxu0 0.0
    %1859 = vmatprep.subr.mxu0 0.0
    %1860 = vmatpush2.msra.mxu0 0.0
    %1861 = vmatprep.subr.mxu0 0.0
    %1862 = vmatpush2.msra.mxu0 0.0
    %1863 = vmatprep.subr.mxu0 0.0
    %1864 = vmatpush2.msra.mxu0 0.0
    %1865 = vmatprep.subr.mxu0 0.0
    %1866 = vmatpush2.msra.mxu0 0.0
    %1867 = vmatprep.subr.mxu0 0.0
    %1868 = vmatpush2.msra.mxu0 0.0
    %1869 = vmatprep.mubr.f32.mxu0 0.0
    %1870 = vmatmul.mubr.f32.gmra.mxu0 %v1803
    %v1871 = vpop.f32.mrf.mxu0
    %v1872 = vadd.f32 %v366, %v1871
    %v1873 = vpop.f32.mrf.mxu0
    %1874 = vdwg.mxu0
    %1875 = vmatprep.subr.mxu0 0.0
    %1876 = vmatpush1.msra.mxu0 0.0
    %1877 = vmatprep.subr.mxu0 0.0
    %1878 = vmatpush1.msra.mxu0 0.0
    %1879 = vmatprep.subr.mxu0 0.0
    %1880 = vmatpush1.msra.mxu0 0.0
    %1881 = vmatprep.subr.mxu0 0.0
    %1882 = vmatpush1.msra.mxu0 0.0
    %1883 = vmatprep.subr.mxu0 0.0
    %1884 = vmatpush1.msra.mxu0 0.0
    %1885 = vmatprep.subr.mxu0 0.0
    %1886 = vmatpush1.msra.mxu0 0.0
    %1887 = vmatprep.subr.mxu0 0.0
    %1888 = vmatpush1.msra.mxu0 0.0
    %1889 = vmatprep.subr.mxu0 0.0
    %1890 = vmatpush1.msra.mxu0 0.0
    %1891 = vmatprep.subr.mxu0 0.0
    %1892 = vmatpush1.msra.mxu0 0.0
    %1893 = vmatprep.subr.mxu0 0.0
    %1894 = vmatpush1.msra.mxu0 0.0
    %1895 = vmatprep.subr.mxu0 0.0
    %1896 = vmatpush1.msra.mxu0 0.0
    %1897 = vmatprep.subr.mxu0 0.0
    %1898 = vmatpush1.msra.mxu0 0.0
    %1899 = vmatprep.subr.mxu0 0.0
    %1900 = vmatpush1.msra.mxu0 %v350
    %1901 = vmatprep.subr.mxu0 0.0
    %1902 = vmatpush1.msra.mxu0 %v349
    %1903 = vmatprep.subr.mxu0 0.0
    %1904 = vmatpush1.msra.mxu0 %v348
    %1905 = vmatprep.subr.mxu0 0.0
    %1906 = vmatpush1.msra.mxu0 %v347
    %1907 = vmatprep.subr.mxu0 0.0
    %1908 = vmatpush2.msra.mxu0 0.0
    %1909 = vmatprep.subr.mxu0 0.0
    %1910 = vmatpush2.msra.mxu0 0.0
    %1911 = vmatprep.subr.mxu0 0.0
    %1912 = vmatpush2.msra.mxu0 0.0
    %1913 = vmatprep.subr.mxu0 0.0
    %1914 = vmatpush2.msra.mxu0 0.0
    %1915 = vmatprep.subr.mxu0 0.0
    %1916 = vmatpush2.msra.mxu0 0.0
    %1917 = vmatprep.subr.mxu0 0.0
    %1918 = vmatpush2.msra.mxu0 0.0
    %1919 = vmatprep.subr.mxu0 0.0
    %1920 = vmatpush2.msra.mxu0 0.0
    %1921 = vmatprep.subr.mxu0 0.0
    %1922 = vmatpush2.msra.mxu0 0.0
    %1923 = vmatprep.subr.mxu0 0.0
    %1924 = vmatpush2.msra.mxu0 0.0
    %1925 = vmatprep.subr.mxu0 0.0
    %1926 = vmatpush2.msra.mxu0 0.0
    %1927 = vmatprep.subr.mxu0 0.0
    %1928 = vmatpush2.msra.mxu0 0.0
    %1929 = vmatprep.subr.mxu0 0.0
    %1930 = vmatpush2.msra.mxu0 0.0
    %1931 = vmatprep.subr.mxu0 0.0
    %1932 = vmatpush2.msra.mxu0 0.0
    %1933 = vmatprep.subr.mxu0 0.0
    %1934 = vmatpush2.msra.mxu0 0.0
    %1935 = vmatprep.subr.mxu0 0.0
    %1936 = vmatpush2.msra.mxu0 0.0
    %1937 = vmatprep.subr.mxu0 0.0
    %1938 = vmatpush2.msra.mxu0 0.0
    %1939 = vmatprep.mubr.f32.mxu0 0.0
    %1940 = vmatmul.mubr.f32.gmra.mxu0 %v1803
    %v1941 = vpop.f32.mrf.mxu0
    %v1942 = vadd.f32 %v445, %v1941
    %v1943 = vpop.f32.mrf.mxu0
    %1944 = vdwg.mxu0
    %1945 = vmatprep.subr.mxu0 0.0
    %1946 = vmatpush1.msra.mxu0 0.0
    %1947 = vmatprep.subr.mxu0 0.0
    %1948 = vmatpush1.msra.mxu0 0.0
    %1949 = vmatprep.subr.mxu0 0.0
    %1950 = vmatpush1.msra.mxu0 0.0
    %1951 = vmatprep.subr.mxu0 0.0
    %1952 = vmatpush1.msra.mxu0 0.0
    %1953 = vmatprep.subr.mxu0 0.0
    %1954 = vmatpush1.msra.mxu0 0.0
    %1955 = vmatprep.subr.mxu0 0.0
    %1956 = vmatpush1.msra.mxu0 0.0
    %1957 = vmatprep.subr.mxu0 0.0
    %1958 = vmatpush1.msra.mxu0 0.0
    %1959 = vmatprep.subr.mxu0 0.0
    %1960 = vmatpush1.msra.mxu0 0.0
    %1961 = vmatprep.subr.mxu0 0.0
    %1962 = vmatpush1.msra.mxu0 0.0
    %1963 = vmatprep.subr.mxu0 0.0
    %1964 = vmatpush1.msra.mxu0 0.0
    %1965 = vmatprep.subr.mxu0 0.0
    %1966 = vmatpush1.msra.mxu0 0.0
    %1967 = vmatprep.subr.mxu0 0.0
    %1968 = vmatpush1.msra.mxu0 0.0
    %1969 = vmatprep.subr.mxu0 0.0
    %1970 = vmatpush1.msra.mxu0 %v354
    %1971 = vmatprep.subr.mxu0 0.0
    %1972 = vmatpush1.msra.mxu0 %v353
    %1973 = vmatprep.subr.mxu0 0.0
    %1974 = vmatpush1.msra.mxu0 %v352
    %1975 = vmatprep.subr.mxu0 0.0
    %1976 = vmatpush1.msra.mxu0 %v351
    %1977 = vmatprep.subr.mxu0 0.0
    %1978 = vmatpush2.msra.mxu0 0.0
    %1979 = vmatprep.subr.mxu0 0.0
    %1980 = vmatpush2.msra.mxu0 0.0
    %1981 = vmatprep.subr.mxu0 0.0
    %1982 = vmatpush2.msra.mxu0 0.0
    %1983 = vmatprep.subr.mxu0 0.0
    %1984 = vmatpush2.msra.mxu0 0.0
    %1985 = vmatprep.subr.mxu0 0.0
    %1986 = vmatpush2.msra.mxu0 0.0
    %1987 = vmatprep.subr.mxu0 0.0
    %1988 = vmatpush2.msra.mxu0 0.0
    %1989 = vmatprep.subr.mxu0 0.0
    %1990 = vmatpush2.msra.mxu0 0.0
    %1991 = vmatprep.subr.mxu0 0.0
    %1992 = vmatpush2.msra.mxu0 0.0
    %1993 = vmatprep.subr.mxu0 0.0
    %1994 = vmatpush2.msra.mxu0 0.0
    %1995 = vmatprep.subr.mxu0 0.0
    %1996 = vmatpush2.msra.mxu0 0.0
    %1997 = vmatprep.subr.mxu0 0.0
    %1998 = vmatpush2.msra.mxu0 0.0
    %1999 = vmatprep.subr.mxu0 0.0
    %2000 = vmatpush2.msra.mxu0 0.0
    %2001 = vmatprep.subr.mxu0 0.0
    %2002 = vmatpush2.msra.mxu0 0.0
    %2003 = vmatprep.subr.mxu0 0.0
    %2004 = vmatpush2.msra.mxu0 0.0
    %2005 = vmatprep.subr.mxu0 0.0
    %2006 = vmatpush2.msra.mxu0 0.0
    %2007 = vmatprep.subr.mxu0 0.0
    %2008 = vmatpush2.msra.mxu0 0.0
    %2009 = vmatprep.mubr.f32.mxu0 0.0
    %2010 = vmatmul.mubr.f32.gmra.mxu0 %v1803
    %v2011 = vpop.f32.mrf.mxu0
    %v2012 = vadd.f32 %v521, %v2011
    %v2013 = vpop.f32.mrf.mxu0
    %2014 = vdwg.mxu0
    %v2015 = vadd.f32 %v1799, %v1872
    %v2016 = vxor.u32 %v2015, 2147483648
    %v2017 = vmul.f32 %v2016, 1.442695
    %v2018 = vpow.pop %v2017
    %v2019 = vadd.f32 %v2018, 1.0
    %v2020 = vrcp.pop %v2019
    %v2021 = vmul.f32 1.0, %v2020
    %v2022 = vadd.f32 %v1800, %v1942
    %v2023 = vxor.u32 %v2022, 2147483648
    %v2024 = vmul.f32 %v2023, 1.442695
    %v2025 = vpow.pop %v2024
    %v2026 = vadd.f32 %v2025, 1.0
    %v2027 = vrcp.pop %v2026
    %v2028 = vmul.f32 1.0, %v2027
    %v2029 = vmul.f32 %v2021, %v2012
    %v2030 = vadd.f32 %v1801, %v2029
    %v2031 = vtanh.pop %v2030
    %v2032 = vsub.f32 1.0, %v2028
    %v2033 = vmul.f32 %v2032, %v2031
    %v2034 = vmul.f32 %v2028, %v1798
    %v2035 = vadd.f32 %v2033, %v2034
    %v2036 = vld [vmem:[#allocation2 + $0xe] sm:$0x3]
    %v2037 = vld [vmem:[#allocation3 + $0xe] sm:$0x3]
    %v2038 = vld [vmem:[#allocation4 + $0xe] sm:$0x3]
    %v2040 = vsel %vm241, %v2035, 0
    %2042 = vmatprep.subr.mxu0 0.0
    %2043 = vmatpush1.msra.mxu0 0.0
    %2044 = vmatprep.subr.mxu0 0.0
    %2045 = vmatpush1.msra.mxu0 0.0
    %2046 = vmatprep.subr.mxu0 0.0
    %2047 = vmatpush1.msra.mxu0 0.0
    %2048 = vmatprep.subr.mxu0 0.0
    %2049 = vmatpush1.msra.mxu0 0.0
    %2050 = vmatprep.subr.mxu0 0.0
    %2051 = vmatpush1.msra.mxu0 0.0
    %2052 = vmatprep.subr.mxu0 0.0
    %2053 = vmatpush1.msra.mxu0 0.0
    %2054 = vmatprep.subr.mxu0 0.0
    %2055 = vmatpush1.msra.mxu0 0.0
    %2056 = vmatprep.subr.mxu0 0.0
    %2057 = vmatpush1.msra.mxu0 0.0
    %2058 = vmatprep.subr.mxu0 0.0
    %2059 = vmatpush1.msra.mxu0 0.0
    %2060 = vmatprep.subr.mxu0 0.0
    %2061 = vmatpush1.msra.mxu0 0.0
    %2062 = vmatprep.subr.mxu0 0.0
    %2063 = vmatpush1.msra.mxu0 0.0
    %2064 = vmatprep.subr.mxu0 0.0
    %2065 = vmatpush1.msra.mxu0 0.0
    %2066 = vmatprep.subr.mxu0 0.0
    %2067 = vmatpush1.msra.mxu0 %v346
    %2068 = vmatprep.subr.mxu0 0.0
    %2069 = vmatpush1.msra.mxu0 %v345
    %2070 = vmatprep.subr.mxu0 0.0
    %2071 = vmatpush1.msra.mxu0 %v344
    %2072 = vmatprep.subr.mxu0 0.0
    %2073 = vmatpush1.msra.mxu0 %v343
    %2074 = vmatprep.subr.mxu0 0.0
    %2075 = vmatpush2.msra.mxu0 0.0
    %2076 = vmatprep.subr.mxu0 0.0
    %2077 = vmatpush2.msra.mxu0 0.0
    %2078 = vmatprep.subr.mxu0 0.0
    %2079 = vmatpush2.msra.mxu0 0.0
    %2080 = vmatprep.subr.mxu0 0.0
    %2081 = vmatpush2.msra.mxu0 0.0
    %2082 = vmatprep.subr.mxu0 0.0
    %2083 = vmatpush2.msra.mxu0 0.0
    %2084 = vmatprep.subr.mxu0 0.0
    %2085 = vmatpush2.msra.mxu0 0.0
    %2086 = vmatprep.subr.mxu0 0.0
    %2087 = vmatpush2.msra.mxu0 0.0
    %2088 = vmatprep.subr.mxu0 0.0
    %2089 = vmatpush2.msra.mxu0 0.0
    %2090 = vmatprep.subr.mxu0 0.0
    %2091 = vmatpush2.msra.mxu0 0.0
    %2092 = vmatprep.subr.mxu0 0.0
    %2093 = vmatpush2.msra.mxu0 0.0
    %2094 = vmatprep.subr.mxu0 0.0
    %2095 = vmatpush2.msra.mxu0 0.0
    %2096 = vmatprep.subr.mxu0 0.0
    %2097 = vmatpush2.msra.mxu0 0.0
    %2098 = vmatprep.subr.mxu0 0.0
    %2099 = vmatpush2.msra.mxu0 0.0
    %2100 = vmatprep.subr.mxu0 0.0
    %2101 = vmatpush2.msra.mxu0 0.0
    %2102 = vmatprep.subr.mxu0 0.0
    %2103 = vmatpush2.msra.mxu0 0.0
    %2104 = vmatprep.subr.mxu0 0.0
    %2105 = vmatpush2.msra.mxu0 0.0
    %2106 = vmatprep.mubr.f32.mxu0 0.0
    %2107 = vmatmul.mubr.f32.gmra.mxu0 %v2040
    %v2108 = vpop.f32.mrf.mxu0
    %v2109 = vadd.f32 %v366, %v2108
    %v2110 = vpop.f32.mrf.mxu0
    %2111 = vdwg.mxu0
    %2112 = vmatprep.subr.mxu0 0.0
    %2113 = vmatpush1.msra.mxu0 0.0
    %2114 = vmatprep.subr.mxu0 0.0
    %2115 = vmatpush1.msra.mxu0 0.0
    %2116 = vmatprep.subr.mxu0 0.0
    %2117 = vmatpush1.msra.mxu0 0.0
    %2118 = vmatprep.subr.mxu0 0.0
    %2119 = vmatpush1.msra.mxu0 0.0
    %2120 = vmatprep.subr.mxu0 0.0
    %2121 = vmatpush1.msra.mxu0 0.0
    %2122 = vmatprep.subr.mxu0 0.0
    %2123 = vmatpush1.msra.mxu0 0.0
    %2124 = vmatprep.subr.mxu0 0.0
    %2125 = vmatpush1.msra.mxu0 0.0
    %2126 = vmatprep.subr.mxu0 0.0
    %2127 = vmatpush1.msra.mxu0 0.0
    %2128 = vmatprep.subr.mxu0 0.0
    %2129 = vmatpush1.msra.mxu0 0.0
    %2130 = vmatprep.subr.mxu0 0.0
    %2131 = vmatpush1.msra.mxu0 0.0
    %2132 = vmatprep.subr.mxu0 0.0
    %2133 = vmatpush1.msra.mxu0 0.0
    %2134 = vmatprep.subr.mxu0 0.0
    %2135 = vmatpush1.msra.mxu0 0.0
    %2136 = vmatprep.subr.mxu0 0.0
    %2137 = vmatpush1.msra.mxu0 %v350
    %2138 = vmatprep.subr.mxu0 0.0
    %2139 = vmatpush1.msra.mxu0 %v349
    %2140 = vmatprep.subr.mxu0 0.0
    %2141 = vmatpush1.msra.mxu0 %v348
    %2142 = vmatprep.subr.mxu0 0.0
    %2143 = vmatpush1.msra.mxu0 %v347
    %2144 = vmatprep.subr.mxu0 0.0
    %2145 = vmatpush2.msra.mxu0 0.0
    %2146 = vmatprep.subr.mxu0 0.0
    %2147 = vmatpush2.msra.mxu0 0.0
    %2148 = vmatprep.subr.mxu0 0.0
    %2149 = vmatpush2.msra.mxu0 0.0
    %2150 = vmatprep.subr.mxu0 0.0
    %2151 = vmatpush2.msra.mxu0 0.0
    %2152 = vmatprep.subr.mxu0 0.0
    %2153 = vmatpush2.msra.mxu0 0.0
    %2154 = vmatprep.subr.mxu0 0.0
    %2155 = vmatpush2.msra.mxu0 0.0
    %2156 = vmatprep.subr.mxu0 0.0
    %2157 = vmatpush2.msra.mxu0 0.0
    %2158 = vmatprep.subr.mxu0 0.0
    %2159 = vmatpush2.msra.mxu0 0.0
    %2160 = vmatprep.subr.mxu0 0.0
    %2161 = vmatpush2.msra.mxu0 0.0
    %2162 = vmatprep.subr.mxu0 0.0
    %2163 = vmatpush2.msra.mxu0 0.0
    %2164 = vmatprep.subr.mxu0 0.0
    %2165 = vmatpush2.msra.mxu0 0.0
    %2166 = vmatprep.subr.mxu0 0.0
    %2167 = vmatpush2.msra.mxu0 0.0
    %2168 = vmatprep.subr.mxu0 0.0
    %2169 = vmatpush2.msra.mxu0 0.0
    %2170 = vmatprep.subr.mxu0 0.0
    %2171 = vmatpush2.msra.mxu0 0.0
    %2172 = vmatprep.subr.mxu0 0.0
    %2173 = vmatpush2.msra.mxu0 0.0
    %2174 = vmatprep.subr.mxu0 0.0
    %2175 = vmatpush2.msra.mxu0 0.0
    %2176 = vmatprep.mubr.f32.mxu0 0.0
    %2177 = vmatmul.mubr.f32.gmra.mxu0 %v2040
    %v2178 = vpop.f32.mrf.mxu0
    %v2179 = vadd.f32 %v445, %v2178
    %v2180 = vpop.f32.mrf.mxu0
    %2181 = vdwg.mxu0
    %2182 = vmatprep.subr.mxu0 0.0
    %2183 = vmatpush1.msra.mxu0 0.0
    %2184 = vmatprep.subr.mxu0 0.0
    %2185 = vmatpush1.msra.mxu0 0.0
    %2186 = vmatprep.subr.mxu0 0.0
    %2187 = vmatpush1.msra.mxu0 0.0
    %2188 = vmatprep.subr.mxu0 0.0
    %2189 = vmatpush1.msra.mxu0 0.0
    %2190 = vmatprep.subr.mxu0 0.0
    %2191 = vmatpush1.msra.mxu0 0.0
    %2192 = vmatprep.subr.mxu0 0.0
    %2193 = vmatpush1.msra.mxu0 0.0
    %2194 = vmatprep.subr.mxu0 0.0
    %2195 = vmatpush1.msra.mxu0 0.0
    %2196 = vmatprep.subr.mxu0 0.0
    %2197 = vmatpush1.msra.mxu0 0.0
    %2198 = vmatprep.subr.mxu0 0.0
    %2199 = vmatpush1.msra.mxu0 0.0
    %2200 = vmatprep.subr.mxu0 0.0
    %2201 = vmatpush1.msra.mxu0 0.0
    %2202 = vmatprep.subr.mxu0 0.0
    %2203 = vmatpush1.msra.mxu0 0.0
    %2204 = vmatprep.subr.mxu0 0.0
    %2205 = vmatpush1.msra.mxu0 0.0
    %2206 = vmatprep.subr.mxu0 0.0
    %2207 = vmatpush1.msra.mxu0 %v354
    %2208 = vmatprep.subr.mxu0 0.0
    %2209 = vmatpush1.msra.mxu0 %v353
    %2210 = vmatprep.subr.mxu0 0.0
    %2211 = vmatpush1.msra.mxu0 %v352
    %2212 = vmatprep.subr.mxu0 0.0
    %2213 = vmatpush1.msra.mxu0 %v351
    %2214 = vmatprep.subr.mxu0 0.0
    %2215 = vmatpush2.msra.mxu0 0.0
    %2216 = vmatprep.subr.mxu0 0.0
    %2217 = vmatpush2.msra.mxu0 0.0
    %2218 = vmatprep.subr.mxu0 0.0
    %2219 = vmatpush2.msra.mxu0 0.0
    %2220 = vmatprep.subr.mxu0 0.0
    %2221 = vmatpush2.msra.mxu0 0.0
    %2222 = vmatprep.subr.mxu0 0.0
    %2223 = vmatpush2.msra.mxu0 0.0
    %2224 = vmatprep.subr.mxu0 0.0
    %2225 = vmatpush2.msra.mxu0 0.0
    %2226 = vmatprep.subr.mxu0 0.0
    %2227 = vmatpush2.msra.mxu0 0.0
    %2228 = vmatprep.subr.mxu0 0.0
    %2229 = vmatpush2.msra.mxu0 0.0
    %2230 = vmatprep.subr.mxu0 0.0
    %2231 = vmatpush2.msra.mxu0 0.0
    %2232 = vmatprep.subr.mxu0 0.0
    %2233 = vmatpush2.msra.mxu0 0.0
    %2234 = vmatprep.subr.mxu0 0.0
    %2235 = vmatpush2.msra.mxu0 0.0
    %2236 = vmatprep.subr.mxu0 0.0
    %2237 = vmatpush2.msra.mxu0 0.0
    %2238 = vmatprep.subr.mxu0 0.0
    %2239 = vmatpush2.msra.mxu0 0.0
    %2240 = vmatprep.subr.mxu0 0.0
    %2241 = vmatpush2.msra.mxu0 0.0
    %2242 = vmatprep.subr.mxu0 0.0
    %2243 = vmatpush2.msra.mxu0 0.0
    %2244 = vmatprep.subr.mxu0 0.0
    %2245 = vmatpush2.msra.mxu0 0.0
    %2246 = vmatprep.mubr.f32.mxu0 0.0
    %2247 = vmatmul.mubr.f32.gmra.mxu0 %v2040
    %v2248 = vpop.f32.mrf.mxu0
    %v2249 = vadd.f32 %v521, %v2248
    %v2250 = vpop.f32.mrf.mxu0
    %2251 = vdwg.mxu0
    %v2252 = vadd.f32 %v2036, %v2109
    %v2253 = vxor.u32 %v2252, 2147483648
    %v2254 = vmul.f32 %v2253, 1.442695
    %v2255 = vpow.pop %v2254
    %v2256 = vadd.f32 %v2255, 1.0
    %v2257 = vrcp.pop %v2256
    %v2258 = vmul.f32 1.0, %v2257
    %v2259 = vadd.f32 %v2037, %v2179
    %v2260 = vxor.u32 %v2259, 2147483648
    %v2261 = vmul.f32 %v2260, 1.442695
    %v2262 = vpow.pop %v2261
    %v2263 = vadd.f32 %v2262, 1.0
    %v2264 = vrcp.pop %v2263
    %v2265 = vmul.f32 1.0, %v2264
    %v2266 = vmul.f32 %v2258, %v2249
    %v2267 = vadd.f32 %v2038, %v2266
    %v2268 = vtanh.pop %v2267
    %v2269 = vsub.f32 1.0, %v2265
    %v2270 = vmul.f32 %v2269, %v2268
    %v2271 = vmul.f32 %v2265, %v2035
    %v2272 = vadd.f32 %v2270, %v2271
    %vm2273 = vcmask 254976
    %2274 = vst.msk [vmem:[#allocation17] sm:$0x3] %vm2273, %v613
    %2275 = vst.msk [vmem:[#allocation17 + $0x2] sm:$0x3] %vm2273, %v850
    %2276 = vst.msk [vmem:[#allocation17 + $0x4] sm:$0x3] %vm2273, %v1087
    %2277 = vst.msk [vmem:[#allocation17 + $0x6] sm:$0x3] %vm2273, %v1324
    %2278 = vst.msk [vmem:[#allocation17 + $0x8] sm:$0x3] %vm2273, %v1561
    %2279 = vst.msk [vmem:[#allocation17 + $0xa] sm:$0x3] %vm2273, %v1798
    %2280 = vst.msk [vmem:[#allocation17 + $0xc] sm:$0x3] %vm2273, %v2035
    %2281 = vst.msk [vmem:[#allocation17 + $0xe] sm:$0x3] %vm2273, %v2272
    // Predicated region
    $region78: #{tpu_custom_call.1} parent=1 // pred_check
      _
    $region79: #{tpu_custom_call.1} parent=1 // pred_check_branch
      %2283 = sbr.rel (0) target = $region81
    $region80: #{tpu_custom_call.1} parent=1 // pred_region
      %s2285 = ssub.s32 256, 256
      %2286 = vsyncadd [#allocation7], %s2285
      %s2287 = sshll.u32 [#allocation17], 4
      %s2288 = int_to_ptr.vmem [resolvable:$true] %s2287
      %2293 = dma.vmem_to_hbm [thread:$0]  %s2288, 256, %s12, [#allocation7], 32, 32, 2
    $region81: #{tpu_custom_call.1} parent=1 // pred_fallthru
      _
    // Predicated region
    $region82: #{tpu_custom_call.1} parent=1 // pred_check
      _
    $region83: #{tpu_custom_call.1} parent=1 // pred_check_branch
      %2295 = sbr.rel (0) target = $region85
    $region84: #{tpu_custom_call.1} parent=1 // pred_region
      %2296 = dma.done [#allocation7], 256
    $region85: #{tpu_custom_call.1} parent=1 // pred_fallthru
      _
    %2297 = vsyncpa [#allocation6], 1
    %2298 = vsyncpa [#allocation9], 1
    %2299 = vsyncpa [#allocation12], 1
    %2300 = vsyncpa [#allocation15], 1
    %2301 = vsyncpa [#allocation7], 1

</llo_original>
